<compile_context>
chip_gen: v7x
topology: tpu7x:2x2x1
jax: 0.10.0
libtpu: 0.0.40
codegen_flags: <defaults>
</compile_context>

<pallas_src>
import math
from functools import partial

import jax
import jax.numpy as jnp
from jax.experimental import pallas as pl
from jax.experimental.pallas import tpu as pltpu


def _flash_mha_kernel(x_q_ref, x_k_ref, x_v_ref,
                      wq_ref, bq_ref, wk_ref, bk_ref, wv_ref, bv_ref,
                      ww_ref, bw_ref,
                      out_ref,
                      q_scr, m_scr, l_scr, acc_scr,
                      *, head_num, dim_head, scale, exp_dtype):
    j = pl.program_id(2)
    n_kv = pl.num_programs(2)
    tq = x_q_ref.shape[1]
    tk = x_k_ref.shape[1]

    # ---- once per (batch, q-tile): project Q, reset online-softmax state ----
    @pl.when(j == 0)
    def _():
        xq = x_q_ref[0]                                              # (tq, E) bf16
        q = jnp.dot(xq, wq_ref[...], preferred_element_type=jnp.float32) + bq_ref[...]
        # Fold 1/sqrt(Dh) into q (O(tq*M) bf16 mul instead of O(H*tq*tk) f32).
        qh = (q * scale).astype(jnp.bfloat16)                        # bf16 BEFORE relayout
        q_scr[...] = jnp.transpose(qh.reshape(tq, head_num, dim_head), (1, 0, 2))
        m_scr[...] = jnp.full(m_scr.shape, -jnp.inf, dtype=m_scr.dtype)
        l_scr[...] = jnp.zeros(l_scr.shape, dtype=l_scr.dtype)
        acc_scr[...] = jnp.zeros(acc_scr.shape, dtype=acc_scr.dtype)

    # ---- project K / V for this kv tile (bf16 MXU operands, f32 accum) ------
    k = (jnp.dot(x_k_ref[0], wk_ref[...], preferred_element_type=jnp.float32)
         + bk_ref[...]).astype(jnp.bfloat16)                         # (tk, M)
    v = (jnp.dot(x_v_ref[0], wv_ref[...], preferred_element_type=jnp.float32)
         + bv_ref[...]).astype(jnp.bfloat16)
    kh = jnp.transpose(k.reshape(tk, head_num, dim_head), (1, 0, 2))  # (H, tk, Dh)
    vh = jnp.transpose(v.reshape(tk, head_num, dim_head), (1, 0, 2))

    # ---- online (flash) softmax update over this kv tile --------------------
    s = jnp.einsum('hqd,hkd->hqk', q_scr[...], kh,
                   preferred_element_type=jnp.float32)                # (H, tq, tk) f32
    m_prev = m_scr[...]
    m_new = jnp.maximum(m_prev, s.max(axis=-1, keepdims=True))
    alpha = jnp.exp(m_prev - m_new)
    # exp_dtype=bf16 on v6e/v7x doubles EUP throughput; keep f32 on v5e.
    p = jnp.exp((s - m_new).astype(exp_dtype)).astype(jnp.float32)
    l_scr[...] = alpha * l_scr[...] + p.sum(axis=-1, keepdims=True)
    acc_scr[...] = alpha * acc_scr[...] + jnp.einsum(
        'hqk,hkd->hqd', p.astype(jnp.bfloat16), vh,
        preferred_element_type=jnp.float32)                           # (H, tq, Dh) f32
    m_scr[...] = m_new

    # ---- finalize: normalize, merge heads, output projection ----------------
    @pl.when(j == n_kv - 1)
    def _():
        o = acc_scr[...] * pl.reciprocal(l_scr[...], approx=True)     # (H, tq, Dh) f32
        s1 = jnp.transpose(o.astype(jnp.bfloat16), (1, 0, 2)).reshape(
            tq, head_num * dim_head)                                  # bf16 before relayout
        out = jnp.dot(s1, ww_ref[...], preferred_element_type=jnp.float32) + bw_ref[...]
        out_ref[0] = out.astype(out_ref.dtype)


def pack_params(params):
    """Pre-pack nn.Linear-style params ONCE at init time.

    Input: (wq, bq, wk, bk, wv, bv, ww, bw) with weights stored (in_dim, out_dim)
    (i.e. already transposed w.r.t. nn.Linear's (out, in)) and 1-D biases.
    Output: bf16 weights, f32 (1, out) biases — kernel-ready, no per-call casts.
    """
    wq, bq, wk, bk, wv, bv, ww, bw = params
    to_w = lambda w: jnp.asarray(w, jnp.bfloat16)
    to_b = lambda b: jnp.asarray(b, jnp.float32).reshape(1, -1)
    return (to_w(wq), to_b(bq), to_w(wk), to_b(bk),
            to_w(wv), to_b(bv), to_w(ww), to_b(bw))


def _pick_tile(n: int, target: int) -> int:
    """Largest tile <= target that divides n and keeps the sublane dim aligned."""
    if n <= target:
        return n
    if n % target == 0:
        return target
    for t in range(target, 0, -1):
        if n % t == 0 and t % 8 == 0:
            return t
    return n  # fall back to full extent


def _vmem_limit_bytes(tq, tk, E, M, O, H, Dh):
    f32, bf16 = 4, 2
    dbl = 2  # auto-pipeliner double-buffers each pipelined operand
    x_bytes = dbl * (tq * E + 2 * tk * E) * bf16
    w_bytes = dbl * (3 * E * M + M * O) * bf16
    b_bytes = dbl * (3 * M + O) * f32
    out_bytes = dbl * tq * O * f32
    scratch = H * tq * Dh * (bf16 + f32) + 2 * H * tq * f32
    live = 3 * H * tq * tk * f32 + 4 * max(tq, tk) * M * f32  # score/prob + proj temps
    total = x_bytes + w_bytes + b_bytes + out_bytes + scratch + live
    return int(min(max(2 * total, 32 * 2**20), 128 * 2**20))


def multi_head_attention(x_q, x_k, x_v, packed_params, *, head_num, dim_head,
                         q_block=256, kv_block=512,
                         exp_dtype=jnp.float32, out_dtype=jnp.float32):
    """Forward pass of MultiHeadAttention (mask_mat=None, use_cache=False).

    Returns `output` of shape (batch, q_seq, dim_out); the PyTorch module's
    second return value (kv cache) is None under the defaults.
    """
    wq, bq, wk, bk, wv, bv, ww, bw = packed_params
    batch, sq, dim_emb = x_q.shape
    _, skv, _ = x_k.shape
    dim_mid = head_num * dim_head
    dim_out = ww.shape[1]
    assert wq.shape == (dim_emb, dim_mid) and ww.shape[0] == dim_mid

    tq = _pick_tile(sq, q_block)
    tk = _pick_tile(skv, kv_block)
    assert sq % tq == 0 and skv % tk == 0
    grid = (batch, sq // tq, skv // tk)          # kv (reduction) axis innermost
    scale = 1.0 / math.sqrt(dim_head)

    x_q_spec = pl.BlockSpec((1, tq, dim_emb), lambda b, i, j: (b, i, 0))
    x_kv_spec = pl.BlockSpec((1, tk, dim_emb), lambda b, i, j: (b, j, 0))
    w_spec = lambda a: pl.BlockSpec(a.shape, lambda b, i, j: (0, 0))  # grid-invariant

    in_specs = [x_q_spec, x_kv_spec, x_kv_spec,
                w_spec(wq), w_spec(bq), w_spec(wk), w_spec(bk),
                w_spec(wv), w_spec(bv), w_spec(ww), w_spec(bw)]
    out_specs = pl.BlockSpec((1, tq, dim_out), lambda b, i, j: (b, i, 0))
    out_shape = jax.ShapeDtypeStruct((batch, sq, dim_out), out_dtype)

    scratch_shapes = [
        pltpu.VMEM((head_num, tq, dim_head), jnp.bfloat16),  # scaled Q (per-head layout)
        pltpu.VMEM((head_num, tq, 1), jnp.float32),          # running max
        pltpu.VMEM((head_num, tq, 1), jnp.float32),          # running sum
        pltpu.VMEM((head_num, tq, dim_head), jnp.float32),   # output accumulator
    ]

    cparams = pltpu.CompilerParams(
        dimension_semantics=("parallel", "parallel", "arbitrary"),
        vmem_limit_bytes=_vmem_limit_bytes(tq, tk, dim_emb, dim_mid, dim_out,
                                           head_num, dim_head))

    kernel = partial(_flash_mha_kernel, head_num=head_num, dim_head=dim_head,
                     scale=scale, exp_dtype=exp_dtype)

    return pl.pallas_call(
        kernel, grid=grid, in_specs=in_specs, out_specs=out_specs,
        out_shape=out_shape, scratch_shapes=scratch_shapes,
        compiler_params=cparams,
    )(x_q.astype(jnp.bfloat16), x_k.astype(jnp.bfloat16), x_v.astype(jnp.bfloat16),
      wq, bq, wk, bk, wv, bv, ww, bw)


def _init_linear(key, fan_in, fan_out):
    # nn.Linear-style uniform init, deterministic; weights stored (in, out).
    kw, kb = jax.random.split(key)
    bound = 1.0 / math.sqrt(fan_in)
    w = jax.random.uniform(kw, (fan_in, fan_out), jnp.float32, -bound, bound)
    b = jax.random.uniform(kb, (fan_out,), jnp.float32, -bound, bound)
    return w, b


def _ref_mha(x_q, x_k, x_v, params, *, head_num, dim_head):
    wq, bq, wk, bk, wv, bv, ww, bw = params
    b, sq, _ = x_q.shape
    _, skv, _ = x_k.shape
    q = (x_q @ wq + bq).reshape(b, sq, head_num, dim_head).transpose(0, 2, 1, 3)
    k = (x_k @ wk + bk).reshape(b, skv, head_num, dim_head).transpose(0, 2, 1, 3)
    v = (x_v @ wv + bv).reshape(b, skv, head_num, dim_head).transpose(0, 2, 1, 3)
    s0 = jnp.einsum('bhqd,bhkd->bhqk', q, k) / math.sqrt(dim_head)
    p = jax.nn.softmax(s0, axis=-1)
    s1 = jnp.einsum('bhqk,bhkd->bhqd', p, v).transpose(0, 2, 1, 3).reshape(
        b, sq, head_num * dim_head)
    return s1 @ ww + bw


if __name__ == "__main__":
    dim_emb, dim_head, dim_out, head_num = 32, 8, 32, 4
    batch, q_seq, kv_seq = 2, 8, 16
    dim_mid = dim_head * head_num

    key = jax.random.PRNGKey(0)
    kq, kk, kv, kw, kx1, kx2, kx3 = jax.random.split(key, 7)
    wq, bq = _init_linear(kq, dim_emb, dim_mid)
    wk, bk = _init_linear(kk, dim_emb, dim_mid)
    wv, bv = _init_linear(kv, dim_emb, dim_mid)
    ww, bw = _init_linear(kw, dim_mid, dim_out)
    raw_params = (wq, bq, wk, bk, wv, bv, ww, bw)
    params = pack_params(raw_params)          # packed ONCE (bf16 weights, f32 biases)

    x = jax.random.normal(kx1, (batch, q_seq, dim_emb), jnp.float32)
    x_k = jax.random.normal(kx2, (batch, kv_seq, dim_emb), jnp.float32)
    x_v = jax.random.normal(kx3, (batch, kv_seq, dim_emb), jnp.float32)

    # bf16 MXU operands with f32 accumulation -> bf16-appropriate tolerance.
    tol = dict(atol=5e-2, rtol=5e-2)

    # 1) Self-attention (single kv tile).
    out_self = jax.block_until_ready(
        multi_head_attention(x, x, x, params, head_num=head_num, dim_head=dim_head))
    ref_self = _ref_mha(x, x, x, raw_params, head_num=head_num, dim_head=dim_head)
    assert out_self.shape == (batch, q_seq, dim_out)
    assert jnp.allclose(out_self, ref_self, **tol)

    # 2) Cross-attention with a longer KV sequence split into two kv tiles,
    #    exercising the online-softmax accumulation across grid steps.
    out_cross = jax.block_until_ready(
        multi_head_attention(x, x_k, x_v, params, head_num=head_num,
                             dim_head=dim_head, kv_block=8))
    ref_cross = _ref_mha(x, x_k, x_v, raw_params, head_num=head_num, dim_head=dim_head)
    assert out_cross.shape == (batch, q_seq, dim_out)
    assert jnp.allclose(out_cross, ref_cross, **tol)

    print("KERNEL_OK")
</pallas_src>

<mosaic_0001>
module attributes {stable_mosaic.version = 11 : i64} {
  func.func @_flash_mha_kernel(%arg0: i32, %arg1: i32, %arg2: i32, %arg3: memref<1x8x32xbf16, #tpu.memory_space<vmem>>, %arg4: memref<1x8x32xbf16, #tpu.memory_space<vmem>>, %arg5: memref<1x8x32xbf16, #tpu.memory_space<vmem>>, %arg6: memref<32x32xbf16, #tpu.memory_space<vmem>>, %arg7: memref<1x32xf32, #tpu.memory_space<vmem>>, %arg8: memref<32x32xbf16, #tpu.memory_space<vmem>>, %arg9: memref<1x32xf32, #tpu.memory_space<vmem>>, %arg10: memref<32x32xbf16, #tpu.memory_space<vmem>>, %arg11: memref<1x32xf32, #tpu.memory_space<vmem>>, %arg12: memref<32x32xbf16, #tpu.memory_space<vmem>>, %arg13: memref<1x32xf32, #tpu.memory_space<vmem>>, %arg14: memref<1x8x32xf32, #tpu.memory_space<vmem>>, %arg15: memref<4x8x8xbf16, #tpu.memory_space<vmem>>, %arg16: memref<4x8x1xf32, #tpu.memory_space<vmem>>, %arg17: memref<4x8x1xf32, #tpu.memory_space<vmem>>, %arg18: memref<4x8x8xf32, #tpu.memory_space<vmem>>) attributes {dimension_semantics = [#tpu.dimension_semantics<parallel>, #tpu.dimension_semantics<parallel>, #tpu.dimension_semantics<arbitrary>], iteration_bounds = array<i64: 2, 1, 1>, scalar_prefetch = 0 : i64, scratch_operands = 4 : i64, tpu.core_type = #tpu.core_type<tc>, window_params = [{transform_indices = @transform_0, window_bounds = array<i64: 1, 8, 32>}, {transform_indices = @transform_1, window_bounds = array<i64: 1, 8, 32>}, {transform_indices = @transform_2, window_bounds = array<i64: 1, 8, 32>}, {pipeline_mode = #tpu.pipeline_mode<synchronous>, transform_indices = @transform_3, window_bounds = array<i64: 32, 32>}, {pipeline_mode = #tpu.pipeline_mode<synchronous>, transform_indices = @transform_4, window_bounds = array<i64: 1, 32>}, {pipeline_mode = #tpu.pipeline_mode<synchronous>, transform_indices = @transform_5, window_bounds = array<i64: 32, 32>}, {pipeline_mode = #tpu.pipeline_mode<synchronous>, transform_indices = @transform_6, window_bounds = array<i64: 1, 32>}, {pipeline_mode = #tpu.pipeline_mode<synchronous>, transform_indices = @transform_7, window_bounds = array<i64: 32, 32>}, {pipeline_mode = #tpu.pipeline_mode<synchronous>, transform_indices = @transform_8, window_bounds = array<i64: 1, 32>}, {pipeline_mode = #tpu.pipeline_mode<synchronous>, transform_indices = @transform_9, window_bounds = array<i64: 32, 32>}, {pipeline_mode = #tpu.pipeline_mode<synchronous>, transform_indices = @transform_10, window_bounds = array<i64: 1, 32>}, {transform_indices = @transform_11, window_bounds = array<i64: 1, 8, 32>}]} {
    %c0_i32 = arith.constant 0 : i32
    %0 = arith.cmpi eq, %arg2, %c0_i32 : i32
    %1 = arith.extui %0 : i1 to i32
    %c0_i32_0 = arith.constant 0 : i32
    %2 = arith.cmpi ne, %1, %c0_i32_0 : i32
    scf.if %2 {
      %c0_42 = arith.constant 0 : index
      %c0_43 = arith.constant 0 : index
      %c0_44 = arith.constant 0 : index
      %51 = vector.load %arg3[%c0_42, %c0_43, %c0_44] : memref<1x8x32xbf16, #tpu.memory_space<vmem>>, vector<1x8x32xbf16>
      %52 = vector.shape_cast %51 : vector<1x8x32xbf16> to vector<8x32xbf16>
      %c0_45 = arith.constant 0 : index
      %c0_46 = arith.constant 0 : index
      %53 = vector.load %arg6[%c0_45, %c0_46] : memref<32x32xbf16, #tpu.memory_space<vmem>>, vector<32x32xbf16>
      %cst_47 = arith.constant dense<0.000000e+00> : vector<8x32xf32>
      %54 = tpu.matmul %52, %53, %cst_47 {dimension_numbers = #tpu.dot_dimension_numbers<[1], [0], [0], [1], [0, 0, 1, 1], [], []>} : vector<8x32xbf16>, vector<32x32xbf16>, vector<8x32xf32> -> vector<8x32xf32>
      %c0_48 = arith.constant 0 : index
      %c0_49 = arith.constant 0 : index
      %55 = vector.load %arg7[%c0_48, %c0_49] : memref<1x32xf32, #tpu.memory_space<vmem>>, vector<1x32xf32>
      %56 = vector.broadcast %55 : vector<1x32xf32> to vector<8x32xf32>
      %57 = arith.addf %54, %56 : vector<8x32xf32>
      %cst_50 = arith.constant 0.353553385 : f32
      %58 = vector.broadcast %cst_50 : f32 to vector<8x32xf32>
      %59 = arith.mulf %57, %58 : vector<8x32xf32>
      %60 = arith.truncf %59 : vector<8x32xf32> to vector<8x32xbf16>
      %61 = vector.shape_cast %60 : vector<8x32xbf16> to vector<8x4x8xbf16>
      %62 = tpu.transpose %61, [1, 0, 2] : vector<8x4x8xbf16> -> vector<4x8x8xbf16>
      %c0_51 = arith.constant 0 : index
      %c0_52 = arith.constant 0 : index
      %c0_53 = arith.constant 0 : index
      %63 = vector.load %arg15[%c0_51, %c0_52, %c0_53] : memref<4x8x8xbf16, #tpu.memory_space<vmem>>, vector<4x8x8xbf16>
      tpu.vector_store %arg15[%c0_51, %c0_52, %c0_53], %62 {strides = array<i32>} : memref<4x8x8xbf16, #tpu.memory_space<vmem>>, vector<4x8x8xbf16>,
      %cst_54 = arith.constant 0xFF800000 : f32
      %64 = vector.broadcast %cst_54 : f32 to vector<4x8x1xf32>
      %c0_55 = arith.constant 0 : index
      %c0_56 = arith.constant 0 : index
      %c0_57 = arith.constant 0 : index
      %65 = vector.load %arg16[%c0_55, %c0_56, %c0_57] : memref<4x8x1xf32, #tpu.memory_space<vmem>>, vector<4x8x1xf32>
      tpu.vector_store %arg16[%c0_55, %c0_56, %c0_57], %64 {strides = array<i32>} : memref<4x8x1xf32, #tpu.memory_space<vmem>>, vector<4x8x1xf32>,
      %cst_58 = arith.constant 0.000000e+00 : f32
      %66 = vector.broadcast %cst_58 : f32 to vector<4x8x1xf32>
      %c0_59 = arith.constant 0 : index
      %c0_60 = arith.constant 0 : index
      %c0_61 = arith.constant 0 : index
      %67 = vector.load %arg17[%c0_59, %c0_60, %c0_61] : memref<4x8x1xf32, #tpu.memory_space<vmem>>, vector<4x8x1xf32>
      tpu.vector_store %arg17[%c0_59, %c0_60, %c0_61], %66 {strides = array<i32>} : memref<4x8x1xf32, #tpu.memory_space<vmem>>, vector<4x8x1xf32>,
      %cst_62 = arith.constant 0.000000e+00 : f32
      %68 = vector.broadcast %cst_62 : f32 to vector<4x8x8xf32>
      %c0_63 = arith.constant 0 : index
      %c0_64 = arith.constant 0 : index
      %c0_65 = arith.constant 0 : index
      %69 = vector.load %arg18[%c0_63, %c0_64, %c0_65] : memref<4x8x8xf32, #tpu.memory_space<vmem>>, vector<4x8x8xf32>
      tpu.vector_store %arg18[%c0_63, %c0_64, %c0_65], %68 {strides = array<i32>} : memref<4x8x8xf32, #tpu.memory_space<vmem>>, vector<4x8x8xf32>,
    } else {
    }
    %c0 = arith.constant 0 : index
    %c0_1 = arith.constant 0 : index
    %c0_2 = arith.constant 0 : index
    %3 = vector.load %arg4[%c0, %c0_1, %c0_2] : memref<1x8x32xbf16, #tpu.memory_space<vmem>>, vector<1x8x32xbf16>
    %4 = vector.shape_cast %3 : vector<1x8x32xbf16> to vector<8x32xbf16>
    %c0_3 = arith.constant 0 : index
    %c0_4 = arith.constant 0 : index
    %5 = vector.load %arg8[%c0_3, %c0_4] : memref<32x32xbf16, #tpu.memory_space<vmem>>, vector<32x32xbf16>
    %cst = arith.constant dense<0.000000e+00> : vector<8x32xf32>
    %6 = tpu.matmul %4, %5, %cst {dimension_numbers = #tpu.dot_dimension_numbers<[1], [0], [0], [1], [0, 0, 1, 1], [], []>} : vector<8x32xbf16>, vector<32x32xbf16>, vector<8x32xf32> -> vector<8x32xf32>
    %c0_5 = arith.constant 0 : index
    %c0_6 = arith.constant 0 : index
    %7 = vector.load %arg9[%c0_5, %c0_6] : memref<1x32xf32, #tpu.memory_space<vmem>>, vector<1x32xf32>
    %8 = vector.broadcast %7 : vector<1x32xf32> to vector<8x32xf32>
    %9 = arith.addf %6, %8 : vector<8x32xf32>
    %10 = arith.truncf %9 : vector<8x32xf32> to vector<8x32xbf16>
    %c0_7 = arith.constant 0 : index
    %c0_8 = arith.constant 0 : index
    %c0_9 = arith.constant 0 : index
    %11 = vector.load %arg5[%c0_7, %c0_8, %c0_9] : memref<1x8x32xbf16, #tpu.memory_space<vmem>>, vector<1x8x32xbf16>
    %12 = vector.shape_cast %11 : vector<1x8x32xbf16> to vector<8x32xbf16>
    %c0_10 = arith.constant 0 : index
    %c0_11 = arith.constant 0 : index
    %13 = vector.load %arg10[%c0_10, %c0_11] : memref<32x32xbf16, #tpu.memory_space<vmem>>, vector<32x32xbf16>
    %cst_12 = arith.constant dense<0.000000e+00> : vector<8x32xf32>
    %14 = tpu.matmul %12, %13, %cst_12 {dimension_numbers = #tpu.dot_dimension_numbers<[1], [0], [0], [1], [0, 0, 1, 1], [], []>} : vector<8x32xbf16>, vector<32x32xbf16>, vector<8x32xf32> -> vector<8x32xf32>
    %c0_13 = arith.constant 0 : index
    %c0_14 = arith.constant 0 : index
    %15 = vector.load %arg11[%c0_13, %c0_14] : memref<1x32xf32, #tpu.memory_space<vmem>>, vector<1x32xf32>
    %16 = vector.broadcast %15 : vector<1x32xf32> to vector<8x32xf32>
    %17 = arith.addf %14, %16 : vector<8x32xf32>
    %18 = arith.truncf %17 : vector<8x32xf32> to vector<8x32xbf16>
    %19 = vector.shape_cast %10 : vector<8x32xbf16> to vector<8x4x8xbf16>
    %20 = tpu.transpose %19, [1, 0, 2] : vector<8x4x8xbf16> -> vector<4x8x8xbf16>
    %21 = vector.shape_cast %18 : vector<8x32xbf16> to vector<8x4x8xbf16>
    %22 = tpu.transpose %21, [1, 0, 2] : vector<8x4x8xbf16> -> vector<4x8x8xbf16>
    %c0_15 = arith.constant 0 : index
    %c0_16 = arith.constant 0 : index
    %c0_17 = arith.constant 0 : index
    %23 = vector.load %arg15[%c0_15, %c0_16, %c0_17] : memref<4x8x8xbf16, #tpu.memory_space<vmem>>, vector<4x8x8xbf16>
    "tpu.trace_start"() <{level = 10 : i32, message = "hqd,hkd->hqk"}> : () -> ()
    %cst_18 = arith.constant dense<0.000000e+00> : vector<4x8x8xf32>
    %24 = tpu.matmul %23, %20, %cst_18 {dimension_numbers = #tpu.dot_dimension_numbers<[2], [2], [1], [1], [0, 0, 0, 1, 1, 1], [0], [0]>} : vector<4x8x8xbf16>, vector<4x8x8xbf16>, vector<4x8x8xf32> -> vector<4x8x8xf32>
    "tpu.trace_stop"() : () -> ()
    %c0_19 = arith.constant 0 : index
    %c0_20 = arith.constant 0 : index
    %c0_21 = arith.constant 0 : index
    %25 = vector.load %arg16[%c0_19, %c0_20, %c0_21] : memref<4x8x1xf32, #tpu.memory_space<vmem>>, vector<4x8x1xf32>
    %cst_22 = arith.constant dense<0xFF800000> : vector<4x8xf32>
    %26 = vector.multi_reduction <maximumf>, %24, %cst_22 [2] : vector<4x8x8xf32> to vector<4x8xf32>
    %27 = vector.shape_cast %26 : vector<4x8xf32> to vector<4x8x1xf32>
    %28 = arith.maximumf %25, %27 : vector<4x8x1xf32>
    %29 = arith.subf %25, %28 : vector<4x8x1xf32>
    %30 = math.exp %29 : vector<4x8x1xf32>
    %31 = vector.broadcast %28 : vector<4x8x1xf32> to vector<4x8x8xf32>
    %32 = arith.subf %24, %31 : vector<4x8x8xf32>
    %33 = math.exp %32 : vector<4x8x8xf32>
    %c0_23 = arith.constant 0 : index
    %c0_24 = arith.constant 0 : index
    %c0_25 = arith.constant 0 : index
    %34 = vector.load %arg17[%c0_23, %c0_24, %c0_25] : memref<4x8x1xf32, #tpu.memory_space<vmem>>, vector<4x8x1xf32>
    %35 = arith.mulf %30, %34 : vector<4x8x1xf32>
    %cst_26 = arith.constant dense<0.000000e+00> : vector<4x8xf32>
    %36 = vector.multi_reduction <add>, %33, %cst_26 [2] : vector<4x8x8xf32> to vector<4x8xf32>
    %37 = vector.shape_cast %36 : vector<4x8xf32> to vector<4x8x1xf32>
    %38 = arith.addf %35, %37 : vector<4x8x1xf32>
    %c0_27 = arith.constant 0 : index
    %c0_28 = arith.constant 0 : index
    %c0_29 = arith.constant 0 : index
    %39 = vector.load %arg17[%c0_27, %c0_28, %c0_29] : memref<4x8x1xf32, #tpu.memory_space<vmem>>, vector<4x8x1xf32>
    tpu.vector_store %arg17[%c0_27, %c0_28, %c0_29], %38 {strides = array<i32>} : memref<4x8x1xf32, #tpu.memory_space<vmem>>, vector<4x8x1xf32>,
    %c0_30 = arith.constant 0 : index
    %c0_31 = arith.constant 0 : index
    %c0_32 = arith.constant 0 : index
    %40 = vector.load %arg18[%c0_30, %c0_31, %c0_32] : memref<4x8x8xf32, #tpu.memory_space<vmem>>, vector<4x8x8xf32>
    %41 = vector.broadcast %30 : vector<4x8x1xf32> to vector<4x8x8xf32>
    %42 = arith.mulf %41, %40 : vector<4x8x8xf32>
    %43 = arith.truncf %33 : vector<4x8x8xf32> to vector<4x8x8xbf16>
    "tpu.trace_start"() <{level = 10 : i32, message = "hqk,hkd->hqd"}> : () -> ()
    %cst_33 = arith.constant dense<0.000000e+00> : vector<4x8x8xf32>
    %44 = tpu.matmul %43, %22, %cst_33 {dimension_numbers = #tpu.dot_dimension_numbers<[2], [1], [1], [2], [0, 0, 0, 1, 1, 2], [0], [0]>} : vector<4x8x8xbf16>, vector<4x8x8xbf16>, vector<4x8x8xf32> -> vector<4x8x8xf32>
    "tpu.trace_stop"() : () -> ()
    %45 = arith.addf %42, %44 : vector<4x8x8xf32>
    %c0_34 = arith.constant 0 : index
    %c0_35 = arith.constant 0 : index
    %c0_36 = arith.constant 0 : index
    %46 = vector.load %arg18[%c0_34, %c0_35, %c0_36] : memref<4x8x8xf32, #tpu.memory_space<vmem>>, vector<4x8x8xf32>
    tpu.vector_store %arg18[%c0_34, %c0_35, %c0_36], %45 {strides = array<i32>} : memref<4x8x8xf32, #tpu.memory_space<vmem>>, vector<4x8x8xf32>,
    %c0_37 = arith.constant 0 : index
    %c0_38 = arith.constant 0 : index
    %c0_39 = arith.constant 0 : index
    %47 = vector.load %arg16[%c0_37, %c0_38, %c0_39] : memref<4x8x1xf32, #tpu.memory_space<vmem>>, vector<4x8x1xf32>
    tpu.vector_store %arg16[%c0_37, %c0_38, %c0_39], %28 {strides = array<i32>} : memref<4x8x1xf32, #tpu.memory_space<vmem>>, vector<4x8x1xf32>,
    %c0_i32_40 = arith.constant 0 : i32
    %48 = arith.cmpi eq, %arg2, %c0_i32_40 : i32
    %49 = arith.extui %48 : i1 to i32
    %c0_i32_41 = arith.constant 0 : i32
    %50 = arith.cmpi ne, %49, %c0_i32_41 : i32
    scf.if %50 {
      %c0_42 = arith.constant 0 : index
      %c0_43 = arith.constant 0 : index
      %c0_44 = arith.constant 0 : index
      %51 = vector.load %arg18[%c0_42, %c0_43, %c0_44] : memref<4x8x8xf32, #tpu.memory_space<vmem>>, vector<4x8x8xf32>
      %c0_45 = arith.constant 0 : index
      %c0_46 = arith.constant 0 : index
      %c0_47 = arith.constant 0 : index
      %52 = vector.load %arg17[%c0_45, %c0_46, %c0_47] : memref<4x8x1xf32, #tpu.memory_space<vmem>>, vector<4x8x1xf32>
      %53 = tpu.reciprocal %52 {approx = true} : vector<4x8x1xf32> -> vector<4x8x1xf32>
      %54 = vector.broadcast %53 : vector<4x8x1xf32> to vector<4x8x8xf32>
      %55 = arith.mulf %51, %54 : vector<4x8x8xf32>
      %56 = arith.truncf %55 : vector<4x8x8xf32> to vector<4x8x8xbf16>
      %57 = tpu.transpose %56, [1, 0, 2] : vector<4x8x8xbf16> -> vector<8x4x8xbf16>
      %58 = vector.shape_cast %57 : vector<8x4x8xbf16> to vector<8x32xbf16>
      %c0_48 = arith.constant 0 : index
      %c0_49 = arith.constant 0 : index
      %59 = vector.load %arg12[%c0_48, %c0_49] : memref<32x32xbf16, #tpu.memory_space<vmem>>, vector<32x32xbf16>
      %cst_50 = arith.constant dense<0.000000e+00> : vector<8x32xf32>
      %60 = tpu.matmul %58, %59, %cst_50 {dimension_numbers = #tpu.dot_dimension_numbers<[1], [0], [0], [1], [0, 0, 1, 1], [], []>} : vector<8x32xbf16>, vector<32x32xbf16>, vector<8x32xf32> -> vector<8x32xf32>
      %c0_51 = arith.constant 0 : index
      %c0_52 = arith.constant 0 : index
      %61 = vector.load %arg13[%c0_51, %c0_52] : memref<1x32xf32, #tpu.memory_space<vmem>>, vector<1x32xf32>
      %62 = vector.broadcast %61 : vector<1x32xf32> to vector<8x32xf32>
      %63 = arith.addf %60, %62 : vector<8x32xf32>
      %c0_53 = arith.constant 0 : index
      %c0_54 = arith.constant 0 : index
      %c0_55 = arith.constant 0 : index
      %64 = vector.load %arg14[%c0_53, %c0_54, %c0_55] : memref<1x8x32xf32, #tpu.memory_space<vmem>>, vector<1x8x32xf32>
      %65 = vector.shape_cast %64 : vector<1x8x32xf32> to vector<8x32xf32>
      %66 = vector.shape_cast %63 : vector<8x32xf32> to vector<1x8x32xf32>
      tpu.vector_store %arg14[%c0_53, %c0_54, %c0_55], %66 {strides = array<i32>} : memref<1x8x32xf32, #tpu.memory_space<vmem>>, vector<1x8x32xf32>,
    } else {
    }
    return
  }
  func.func @transform_0(%arg0: i32, %arg1: i32, %arg2: i32) -> (i32, i32, i32) {
    %c0_i32 = arith.constant 0 : i32
    %c0_i32_0 = arith.constant 0 : i32
    return %arg0, %arg1, %c0_i32 : i32, i32, i32
  }
  func.func @transform_1(%arg0: i32, %arg1: i32, %arg2: i32) -> (i32, i32, i32) {
    %c0_i32 = arith.constant 0 : i32
    %c0_i32_0 = arith.constant 0 : i32
    return %arg0, %arg2, %c0_i32 : i32, i32, i32
  }
  func.func @transform_2(%arg0: i32, %arg1: i32, %arg2: i32) -> (i32, i32, i32) {
    %c0_i32 = arith.constant 0 : i32
    %c0_i32_0 = arith.constant 0 : i32
    return %arg0, %arg2, %c0_i32 : i32, i32, i32
  }
  func.func @transform_3(%arg0: i32, %arg1: i32, %arg2: i32) -> (i32, i32) {
    %c0_i32 = arith.constant 0 : i32
    %c0_i32_0 = arith.constant 0 : i32
    %c0_i32_1 = arith.constant 0 : i32
    return %c0_i32, %c0_i32_0 : i32, i32
  }
  func.func @transform_4(%arg0: i32, %arg1: i32, %arg2: i32) -> (i32, i32) {
    %c0_i32 = arith.constant 0 : i32
    %c0_i32_0 = arith.constant 0 : i32
    %c0_i32_1 = arith.constant 0 : i32
    return %c0_i32, %c0_i32_0 : i32, i32
  }
  func.func @transform_5(%arg0: i32, %arg1: i32, %arg2: i32) -> (i32, i32) {
    %c0_i32 = arith.constant 0 : i32
    %c0_i32_0 = arith.constant 0 : i32
    %c0_i32_1 = arith.constant 0 : i32
    return %c0_i32, %c0_i32_0 : i32, i32
  }
  func.func @transform_6(%arg0: i32, %arg1: i32, %arg2: i32) -> (i32, i32) {
    %c0_i32 = arith.constant 0 : i32
    %c0_i32_0 = arith.constant 0 : i32
    %c0_i32_1 = arith.constant 0 : i32
    return %c0_i32, %c0_i32_0 : i32, i32
  }
  func.func @transform_7(%arg0: i32, %arg1: i32, %arg2: i32) -> (i32, i32) {
    %c0_i32 = arith.constant 0 : i32
    %c0_i32_0 = arith.constant 0 : i32
    %c0_i32_1 = arith.constant 0 : i32
    return %c0_i32, %c0_i32_0 : i32, i32
  }
  func.func @transform_8(%arg0: i32, %arg1: i32, %arg2: i32) -> (i32, i32) {
    %c0_i32 = arith.constant 0 : i32
    %c0_i32_0 = arith.constant 0 : i32
    %c0_i32_1 = arith.constant 0 : i32
    return %c0_i32, %c0_i32_0 : i32, i32
  }
  func.func @transform_9(%arg0: i32, %arg1: i32, %arg2: i32) -> (i32, i32) {
    %c0_i32 = arith.constant 0 : i32
    %c0_i32_0 = arith.constant 0 : i32
    %c0_i32_1 = arith.constant 0 : i32
    return %c0_i32, %c0_i32_0 : i32, i32
  }
  func.func @transform_10(%arg0: i32, %arg1: i32, %arg2: i32) -> (i32, i32) {
    %c0_i32 = arith.constant 0 : i32
    %c0_i32_0 = arith.constant 0 : i32
    %c0_i32_1 = arith.constant 0 : i32
    return %c0_i32, %c0_i32_0 : i32, i32
  }
  func.func @transform_11(%arg0: i32, %arg1: i32, %arg2: i32) -> (i32, i32, i32) {
    %c0_i32 = arith.constant 0 : i32
    %c0_i32_0 = arith.constant 0 : i32
    return %arg0, %arg1, %c0_i32 : i32, i32, i32
  }
}

</mosaic_0001>

<llo_original>
// kernel: tpu_custom_call.1
$region0: #{tpu_custom_call.1}
  #allocation0 [shape = 'u32[]', space=smem, size = 0x4, offset = 0x4, fixed_abs, tag = 'smem constant byte address 0x4 - core index']
  #allocation1 [shape = 'u32[144,128]{1,0:T(1,128)}', space=vmem, size = 0x12000, scoped, tag = 'internal scratch']
  #allocation2 [shape = 'bf16[4,8,8]{2,1,0:T(8,128)(2,1)}', space=vmem, size = 0x2000, scoped, tag = 'scratch operand']
  #allocation3 [shape = 'f32[4,8,1]{2,1,0:T(8,128)}', space=vmem, size = 0x4000, scoped, tag = 'scratch operand']
  #allocation4 [shape = 'f32[4,8,1]{2,1,0:T(8,128)}', space=vmem, size = 0x4000, scoped, tag = 'scratch operand']
  #allocation5 [shape = 'f32[4,8,8]{2,1,0:T(8,128)}', space=vmem, size = 0x4000, scoped, tag = 'scratch operand']
  %s0 = inlined_call_operand.hbm [shape: bf16[2,8,32], index: 0, kind: input, shape index: {}]
  %s1 = inlined_call_operand.hbm [shape: bf16[2,8,32], index: 1, kind: input, shape index: {}]
  %s2 = inlined_call_operand.hbm [shape: bf16[2,8,32], index: 2, kind: input, shape index: {}]
  %s3 = inlined_call_operand.hbm [shape: bf16[32,32], index: 3, kind: input, shape index: {}]
  %s4 = inlined_call_operand.vmem [shape: f32[1,32], index: 4, kind: input, shape index: {}]
  %s5 = inlined_call_operand.vmem [shape: bf16[32,32], index: 5, kind: input, shape index: {}]
  %s6 = inlined_call_operand.vmem [shape: f32[1,32], index: 6, kind: input, shape index: {}]
  %s7 = inlined_call_operand.hbm [shape: bf16[32,32], index: 7, kind: input, shape index: {}]
  %s8 = inlined_call_operand.hbm [shape: f32[1,32], index: 8, kind: input, shape index: {}]
  %s9 = inlined_call_operand.vmem [shape: bf16[32,32], index: 9, kind: input, shape index: {}]
  %s10 = inlined_call_operand.vmem [shape: f32[1,32], index: 10, kind: input, shape index: {}]
  %s11 = inlined_call_operand.hbm [shape: f32[2,8,32], index: 11, kind: output, shape index: {}]
  %s12 = sld [smem:[#allocation0]]
  $region109: #{tpu_custom_call.1} parent=0
    _
  %s14 = ssub.s32 1, %s12
  %s15 = scalar_select 0, %s14, %s12
  $region1: #{tpu_custom_call.1} parent=0
    #allocation6 [shape = 'u8[4096]{0}', space=vmem, size = 0x1000, scoped, tag = 'input window, operand 0']
    #allocation7 [shape = 's32[2]{0}', space=sflag, size = 0x8, scoped, tag = 'scoped memory for tpu_custom_call.1']
    #allocation8 [shape = 's32[2]{0}', space=sflag, size = 0x8, scoped, tag = 'scoped memory for tpu_custom_call.1']
    #allocation9 [shape = 'u8[4096]{0}', space=vmem, size = 0x1000, scoped, tag = 'input window, operand 1']
    #allocation10 [shape = 's32[2]{0}', space=sflag, size = 0x8, scoped, tag = 'scoped memory for tpu_custom_call.1']
    #allocation11 [shape = 'u8[4096]{0}', space=vmem, size = 0x1000, scoped, tag = 'input window, operand 2']
    #allocation12 [shape = 'u8[8192]{0}', space=vmem, size = 0x2000, scoped, tag = 'input window, operand 3, single buffered']
    #allocation13 [shape = 's32[1]{0}', space=sflag, size = 0x4, scoped, tag = 'scoped memory for tpu_custom_call.1']
    #allocation14 [shape = 'u8[8192]{0}', space=vmem, size = 0x2000, scoped, tag = 'input window, operand 7, single buffered']
    #allocation15 [shape = 'u8[512]{0}', space=vmem, size = 0x400, scoped, tag = 'input window, operand 8, single buffered']
    #allocation16 [shape = 's32[1]{0}', space=sflag, size = 0x4, scoped, tag = 'scoped memory for tpu_custom_call.1']
    #allocation17 [shape = 'u8[8192]{0}', space=vmem, size = 0x2000, scoped, tag = 'output window, operand 0']
    %16 = vsyncpa [#allocation7], 0
    %s17 = scalar_lea.sflag [#allocation7], 1
    %18 = vsyncpa %s17, 0
    %19 = vsyncpa [#allocation10], 0
    %s20 = scalar_lea.sflag [#allocation10], 1
    %21 = vsyncpa %s20, 0
    %22 = vsyncpa [#allocation13], 0
    %23 = vsyncpa [#allocation16], 0
    %24 = vsyncpa [#allocation8], 0
    %s25 = scalar_lea.sflag [#allocation8], 1
    %26 = vsyncpa %s25, 0
    loop: start=0, step=1, limit=4
    $region2: #{tpu_custom_call.1} parent=1 // loop_pre_header
      _
    $region3: #{tpu_custom_call.1} parent=1 // loop_header
      %s28 = sphi 0, %s32
      %p29 = scmp.ge.s32.totalorder %s28, 4
      %s35 = sphi 0, %s54
      %s36 = sphi 0, %s50
      %s37 = sphi 0, %s46
      %s38 = sphi 0, %s35
      %s39 = sphi 0, %s36
      %s40 = sphi 0, %s37
      %s41 = sphi 0, %s38
      %s42 = sphi 0, %s39
      %s43 = sphi 0, %s40
      %s59 = sphi 0, %s61
      %s62 = sphi 0, %s59
      %s63 = sphi 0, %s62
      %s79 = sphi 0, %s63
      %s87 = sphi 0, %s89
      %s90 = sphi 0, %s87
      %s91 = sphi 0, %s90
      %s107 = sphi 0, %s91
      %s115 = sphi 0, %s117
      %s118 = sphi 0, %s115
      %s119 = sphi 0, %s118
      %s135 = sphi 0, %s119
      %s139 = sphi 0, %s139
      %s141 = sphi 0, %s139
      %s142 = sphi 0, %s141
      %s156 = sphi 0, %s142
      %s160 = sphi 0, %s160
      %s162 = sphi 0, %s160
      %s163 = sphi 0, %s162
      %s177 = sphi 0, %s163
      %s181 = sphi 0, %s181
      %s183 = sphi 0, %s181
      %s184 = sphi 0, %s183
      %s198 = sphi 0, %s184
      %s202 = sphi 0, %s202
      %s204 = sphi 0, %s202
      %s205 = sphi 0, %s204
      %s219 = sphi 0, %s205
      %s223 = sphi 0, %s223
      %s225 = sphi 0, %s223
      %s226 = sphi 0, %s225
      %s240 = sphi 0, %s226
      %s244 = sphi 0, %s244
      %s246 = sphi 0, %s244
      %s247 = sphi 0, %s246
      %s261 = sphi 0, %s247
      %s265 = sphi 0, %s265
      %s267 = sphi 0, %s265
      %s268 = sphi 0, %s267
      %s282 = sphi 0, %s268
      %s286 = sphi 0, %s286
      %s288 = sphi 0, %s286
      %s289 = sphi 0, %s288
      %s303 = sphi 0, %s289
      %s311 = sphi 0, %s313
      %s314 = sphi 0, %s311
      %s315 = sphi 0, %s314
      %s331 = sphi 0, %s315
    $region4: #{tpu_custom_call.1} parent=1 // loop_header_branch
      %31 = sbr.rel (%p29) target = $region8
    $region5: #{tpu_custom_call.1} parent=1 // loop_body
      %s33 = ssub.s32 %s28, 1
      %s34 = ssub.s32 %s28, 2
      %s44 = sadd.s32 1, %s37
      %p45 = scmp.ge.s32.totalorder %s44, 1
      %s46 = scalar_select %p45, 0, %s44
      %s47 = sadd.s32 1, %s36
      %s48 = scalar_select %p45, %s47, %s36
      %p49 = scmp.ge.s32.totalorder %s48, 1
      %s50 = scalar_select %p49, 0, %s48
      %s51 = sadd.s32 1, %s35
      %s52 = scalar_select %p49, %s51, %s35
      %p53 = scmp.ge.s32.totalorder %s52, 2
      %s54 = scalar_select %p53, 0, %s52
      %s55 = ssub.s32 %s35, %s54
      %s56 = ssub.s32 %s36, %s50
      %s57 = sor.u32 %s55, %s56
      %p58 = scmp.eq.s32.totalorder %s57, 0
      %s60 = sadd.s32 %s59, 1
      %s61 = scalar_select %p58, %s59, %s60
      %p64 = pneg %p58
      %p65 = scmp.eq.s32.totalorder %s28, 1
      %p66 = por %p64, %p65
      %p67 = scmp.ne.s32.totalorder %s59, %s62
      %p68 = scmp.eq.s32.totalorder %s28, 0
      %p69 = por %p67, %p68
      %p70 = scmp.ne.s32.totalorder %s59, %s62
      %p71 = scmp.eq.s32.totalorder %s33, 1
      %p72 = por %p70, %p71
      %p73 = scmp.ne.s32.totalorder %s62, %s63
      %p74 = scmp.eq.s32.totalorder %s33, 0
      %p75 = por %p73, %p74
      %p76 = scmp.ne.s32.totalorder %s62, %s63
      %p77 = scmp.eq.s32.totalorder %s34, 1
      %p78 = por %p76, %p77
      %p80 = scmp.ne.s32.totalorder %s63, %s79
      %p81 = scmp.eq.s32.totalorder %s34, 0
      %p82 = por %p80, %p81
      %s83 = ssub.s32 %s35, %s54
      %s84 = ssub.s32 %s37, %s46
      %s85 = sor.u32 %s83, %s84
      %p86 = scmp.eq.s32.totalorder %s85, 0
      %s88 = sadd.s32 %s87, 1
      %s89 = scalar_select %p86, %s87, %s88
      %p92 = pneg %p86
      %p93 = scmp.eq.s32.totalorder %s28, 1
      %p94 = por %p92, %p93
      %p95 = scmp.ne.s32.totalorder %s87, %s90
      %p96 = scmp.eq.s32.totalorder %s28, 0
      %p97 = por %p95, %p96
      %p98 = scmp.ne.s32.totalorder %s87, %s90
      %p99 = scmp.eq.s32.totalorder %s33, 1
      %p100 = por %p98, %p99
      %p101 = scmp.ne.s32.totalorder %s90, %s91
      %p102 = scmp.eq.s32.totalorder %s33, 0
      %p103 = por %p101, %p102
      %p104 = scmp.ne.s32.totalorder %s90, %s91
      %p105 = scmp.eq.s32.totalorder %s34, 1
      %p106 = por %p104, %p105
      %p108 = scmp.ne.s32.totalorder %s91, %s107
      %p109 = scmp.eq.s32.totalorder %s34, 0
      %p110 = por %p108, %p109
      %s111 = ssub.s32 %s35, %s54
      %s112 = ssub.s32 %s37, %s46
      %s113 = sor.u32 %s111, %s112
      %p114 = scmp.eq.s32.totalorder %s113, 0
      %s116 = sadd.s32 %s115, 1
      %s117 = scalar_select %p114, %s115, %s116
      %p120 = pneg %p114
      %p121 = scmp.eq.s32.totalorder %s28, 1
      %p122 = por %p120, %p121
      %p123 = scmp.ne.s32.totalorder %s115, %s118
      %p124 = scmp.eq.s32.totalorder %s28, 0
      %p125 = por %p123, %p124
      %p126 = scmp.ne.s32.totalorder %s115, %s118
      %p127 = scmp.eq.s32.totalorder %s33, 1
      %p128 = por %p126, %p127
      %p129 = scmp.ne.s32.totalorder %s118, %s119
      %p130 = scmp.eq.s32.totalorder %s33, 0
      %p131 = por %p129, %p130
      %p132 = scmp.ne.s32.totalorder %s118, %s119
      %p133 = scmp.eq.s32.totalorder %s34, 1
      %p134 = por %p132, %p133
      %p136 = scmp.ne.s32.totalorder %s119, %s135
      %p137 = scmp.eq.s32.totalorder %s34, 0
      %p138 = por %p136, %p137
      %s140 = sadd.s32 %s139, 1
      %p143 = scmp.eq.s32.totalorder %s28, 1
      %p144 = scmp.ne.s32.totalorder %s139, %s141
      %p145 = scmp.eq.s32.totalorder %s28, 0
      %p146 = por %p144, %p145
      %p147 = scmp.ne.s32.totalorder %s139, %s141
      %p148 = scmp.eq.s32.totalorder %s33, 1
      %p149 = por %p147, %p148
      %p150 = scmp.ne.s32.totalorder %s141, %s142
      %p151 = scmp.eq.s32.totalorder %s33, 0
      %p152 = por %p150, %p151
      %p153 = scmp.ne.s32.totalorder %s141, %s142
      %p154 = scmp.eq.s32.totalorder %s34, 1
      %p155 = por %p153, %p154
      %p157 = scmp.ne.s32.totalorder %s142, %s156
      %p158 = scmp.eq.s32.totalorder %s34, 0
      %p159 = por %p157, %p158
      %s161 = sadd.s32 %s160, 1
      %p164 = scmp.eq.s32.totalorder %s28, 1
      %p165 = scmp.ne.s32.totalorder %s160, %s162
      %p166 = scmp.eq.s32.totalorder %s28, 0
      %p167 = por %p165, %p166
      %p168 = scmp.ne.s32.totalorder %s160, %s162
      %p169 = scmp.eq.s32.totalorder %s33, 1
      %p170 = por %p168, %p169
      %p171 = scmp.ne.s32.totalorder %s162, %s163
      %p172 = scmp.eq.s32.totalorder %s33, 0
      %p173 = por %p171, %p172
      %p174 = scmp.ne.s32.totalorder %s162, %s163
      %p175 = scmp.eq.s32.totalorder %s34, 1
      %p176 = por %p174, %p175
      %p178 = scmp.ne.s32.totalorder %s163, %s177
      %p179 = scmp.eq.s32.totalorder %s34, 0
      %p180 = por %p178, %p179
      %s182 = sadd.s32 %s181, 1
      %p185 = scmp.eq.s32.totalorder %s28, 1
      %p186 = scmp.ne.s32.totalorder %s181, %s183
      %p187 = scmp.eq.s32.totalorder %s28, 0
      %p188 = por %p186, %p187
      %p189 = scmp.ne.s32.totalorder %s181, %s183
      %p190 = scmp.eq.s32.totalorder %s33, 1
      %p191 = por %p189, %p190
      %p192 = scmp.ne.s32.totalorder %s183, %s184
      %p193 = scmp.eq.s32.totalorder %s33, 0
      %p194 = por %p192, %p193
      %p195 = scmp.ne.s32.totalorder %s183, %s184
      %p196 = scmp.eq.s32.totalorder %s34, 1
      %p197 = por %p195, %p196
      %p199 = scmp.ne.s32.totalorder %s184, %s198
      %p200 = scmp.eq.s32.totalorder %s34, 0
      %p201 = por %p199, %p200
      %s203 = sadd.s32 %s202, 1
      %p206 = scmp.eq.s32.totalorder %s28, 1
      %p207 = scmp.ne.s32.totalorder %s202, %s204
      %p208 = scmp.eq.s32.totalorder %s28, 0
      %p209 = por %p207, %p208
      %p210 = scmp.ne.s32.totalorder %s202, %s204
      %p211 = scmp.eq.s32.totalorder %s33, 1
      %p212 = por %p210, %p211
      %p213 = scmp.ne.s32.totalorder %s204, %s205
      %p214 = scmp.eq.s32.totalorder %s33, 0
      %p215 = por %p213, %p214
      %p216 = scmp.ne.s32.totalorder %s204, %s205
      %p217 = scmp.eq.s32.totalorder %s34, 1
      %p218 = por %p216, %p217
      %p220 = scmp.ne.s32.totalorder %s205, %s219
      %p221 = scmp.eq.s32.totalorder %s34, 0
      %p222 = por %p220, %p221
      %s224 = sadd.s32 %s223, 1
      %p227 = scmp.eq.s32.totalorder %s28, 1
      %p228 = scmp.ne.s32.totalorder %s223, %s225
      %p229 = scmp.eq.s32.totalorder %s28, 0
      %p230 = por %p228, %p229
      %p231 = scmp.ne.s32.totalorder %s223, %s225
      %p232 = scmp.eq.s32.totalorder %s33, 1
      %p233 = por %p231, %p232
      %p234 = scmp.ne.s32.totalorder %s225, %s226
      %p235 = scmp.eq.s32.totalorder %s33, 0
      %p236 = por %p234, %p235
      %p237 = scmp.ne.s32.totalorder %s225, %s226
      %p238 = scmp.eq.s32.totalorder %s34, 1
      %p239 = por %p237, %p238
      %p241 = scmp.ne.s32.totalorder %s226, %s240
      %p242 = scmp.eq.s32.totalorder %s34, 0
      %p243 = por %p241, %p242
      %s245 = sadd.s32 %s244, 1
      %p248 = scmp.eq.s32.totalorder %s28, 1
      %p249 = scmp.ne.s32.totalorder %s244, %s246
      %p250 = scmp.eq.s32.totalorder %s28, 0
      %p251 = por %p249, %p250
      %p252 = scmp.ne.s32.totalorder %s244, %s246
      %p253 = scmp.eq.s32.totalorder %s33, 1
      %p254 = por %p252, %p253
      %p255 = scmp.ne.s32.totalorder %s246, %s247
      %p256 = scmp.eq.s32.totalorder %s33, 0
      %p257 = por %p255, %p256
      %p258 = scmp.ne.s32.totalorder %s246, %s247
      %p259 = scmp.eq.s32.totalorder %s34, 1
      %p260 = por %p258, %p259
      %p262 = scmp.ne.s32.totalorder %s247, %s261
      %p263 = scmp.eq.s32.totalorder %s34, 0
      %p264 = por %p262, %p263
      %s266 = sadd.s32 %s265, 1
      %p269 = scmp.eq.s32.totalorder %s28, 1
      %p270 = scmp.ne.s32.totalorder %s265, %s267
      %p271 = scmp.eq.s32.totalorder %s28, 0
      %p272 = por %p270, %p271
      %p273 = scmp.ne.s32.totalorder %s265, %s267
      %p274 = scmp.eq.s32.totalorder %s33, 1
      %p275 = por %p273, %p274
      %p276 = scmp.ne.s32.totalorder %s267, %s268
      %p277 = scmp.eq.s32.totalorder %s33, 0
      %p278 = por %p276, %p277
      %p279 = scmp.ne.s32.totalorder %s267, %s268
      %p280 = scmp.eq.s32.totalorder %s34, 1
      %p281 = por %p279, %p280
      %p283 = scmp.ne.s32.totalorder %s268, %s282
      %p284 = scmp.eq.s32.totalorder %s34, 0
      %p285 = por %p283, %p284
      %s287 = sadd.s32 %s286, 1
      %p290 = scmp.eq.s32.totalorder %s28, 1
      %p291 = scmp.ne.s32.totalorder %s286, %s288
      %p292 = scmp.eq.s32.totalorder %s28, 0
      %p293 = por %p291, %p292
      %p294 = scmp.ne.s32.totalorder %s286, %s288
      %p295 = scmp.eq.s32.totalorder %s33, 1
      %p296 = por %p294, %p295
      %p297 = scmp.ne.s32.totalorder %s288, %s289
      %p298 = scmp.eq.s32.totalorder %s33, 0
      %p299 = por %p297, %p298
      %p300 = scmp.ne.s32.totalorder %s288, %s289
      %p301 = scmp.eq.s32.totalorder %s34, 1
      %p302 = por %p300, %p301
      %p304 = scmp.ne.s32.totalorder %s289, %s303
      %p305 = scmp.eq.s32.totalorder %s34, 0
      %p306 = por %p304, %p305
      %s307 = ssub.s32 %s35, %s54
      %s308 = ssub.s32 %s36, %s50
      %s309 = sor.u32 %s307, %s308
      %p310 = scmp.eq.s32.totalorder %s309, 0
      %s312 = sadd.s32 %s311, 1
      %s313 = scalar_select %p310, %s311, %s312
      %p316 = pneg %p310
      %p317 = scmp.eq.s32.totalorder %s28, 1
      %p318 = por %p316, %p317
      %p319 = scmp.ne.s32.totalorder %s311, %s314
      %p320 = scmp.eq.s32.totalorder %s28, 0
      %p321 = por %p319, %p320
      %p322 = scmp.ne.s32.totalorder %s311, %s314
      %p323 = scmp.eq.s32.totalorder %s33, 1
      %p324 = por %p322, %p323
      %p325 = scmp.ne.s32.totalorder %s314, %s315
      %p326 = scmp.eq.s32.totalorder %s33, 0
      %p327 = por %p325, %p326
      %p328 = scmp.ne.s32.totalorder %s314, %s315
      %p329 = scmp.eq.s32.totalorder %s34, 1
      %p330 = por %p328, %p329
      %p332 = scmp.ne.s32.totalorder %s315, %s331
      %p333 = scmp.eq.s32.totalorder %s34, 0
      %p334 = por %p332, %p333
      %p335 = scmp.le.s32.totalorder 1, %s28
      %p336 = scmp.lt.s32.totalorder %s28, 3
      %p337 = pnand %p335, %p336
      %p338 = pneg %p337
      // Predicated region
      $region9: #{tpu_custom_call.1} parent=5 // pred_check
        _
      $region10: #{tpu_custom_call.1} parent=5 // pred_check_branch
        %340 = sbr.rel (%p337) target = $region12
      $region11: #{tpu_custom_call.1} parent=5 // pred_region
        %s341 = ssub.s32 %s28, 1
        // Predicated region
        $region13: #{tpu_custom_call.1} parent=11 // pred_check
          %p342 = pneg %p152
        $region14: #{tpu_custom_call.1} parent=11 // pred_check_branch
          %344 = sbr.rel (%p342) target = $region16
        $region15: #{tpu_custom_call.1} parent=11 // pred_region
          %s346 = ssub.s32 256, 256
          %347 = vsyncadd [#allocation13], %s346
          %s348 = sshll.u32 [#allocation12], 4
          %s349 = int_to_ptr.vmem [resolvable:$true] %s348
          %354 = dma.hbm_to_vmem [thread:$0]  %s3, 256, %s349, [#allocation13], 64, 64, 4
        $region16: #{tpu_custom_call.1} parent=11 // pred_fallthru
          _
        // Predicated region
        $region17: #{tpu_custom_call.1} parent=11 // pred_check
          %p355 = pneg %p173
        $region18: #{tpu_custom_call.1} parent=11 // pred_check_branch
          %357 = sbr.rel (%p355) target = $region20
        $region19: #{tpu_custom_call.1} parent=11 // pred_region
          _
        $region20: #{tpu_custom_call.1} parent=11 // pred_fallthru
          _
        // Predicated region
        $region21: #{tpu_custom_call.1} parent=11 // pred_check
          %p358 = pneg %p194
        $region22: #{tpu_custom_call.1} parent=11 // pred_check_branch
          %360 = sbr.rel (%p358) target = $region24
        $region23: #{tpu_custom_call.1} parent=11 // pred_region
          _
        $region24: #{tpu_custom_call.1} parent=11 // pred_fallthru
          _
        // Predicated region
        $region25: #{tpu_custom_call.1} parent=11 // pred_check
          %p361 = pneg %p215
        $region26: #{tpu_custom_call.1} parent=11 // pred_check_branch
          %363 = sbr.rel (%p361) target = $region28
        $region27: #{tpu_custom_call.1} parent=11 // pred_region
          _
        $region28: #{tpu_custom_call.1} parent=11 // pred_fallthru
          _
        // Predicated region
        $region29: #{tpu_custom_call.1} parent=11 // pred_check
          %p364 = pneg %p236
        $region30: #{tpu_custom_call.1} parent=11 // pred_check_branch
          %366 = sbr.rel (%p364) target = $region32
        $region31: #{tpu_custom_call.1} parent=11 // pred_region
          %s368 = ssub.s32 256, 256
          %369 = vsyncadd [#allocation13], %s368
          %s370 = sshll.u32 [#allocation14], 4
          %s371 = int_to_ptr.vmem [resolvable:$true] %s370
          %376 = dma.hbm_to_vmem [thread:$0]  %s7, 256, %s371, [#allocation13], 64, 64, 4
        $region32: #{tpu_custom_call.1} parent=11 // pred_fallthru
          _
        // Predicated region
        $region33: #{tpu_custom_call.1} parent=11 // pred_check
          %p377 = pneg %p257
        $region34: #{tpu_custom_call.1} parent=11 // pred_check_branch
          %379 = sbr.rel (%p377) target = $region36
        $region35: #{tpu_custom_call.1} parent=11 // pred_region
          %s381 = ssub.s32 16, 16
          %382 = vsyncadd [#allocation16], %s381
          %s384 = sshll.u32 [#allocation15], 4
          %s385 = int_to_ptr.vmem [resolvable:$true] %s384
          %387 = dma.hbm_to_vmem [thread:$0]  %s8, 16, %s385, [#allocation16]
        $region36: #{tpu_custom_call.1} parent=11 // pred_fallthru
          _
        // Predicated region
        $region37: #{tpu_custom_call.1} parent=11 // pred_check
          %p388 = pneg %p278
        $region38: #{tpu_custom_call.1} parent=11 // pred_check_branch
          %390 = sbr.rel (%p388) target = $region40
        $region39: #{tpu_custom_call.1} parent=11 // pred_region
          _
        $region40: #{tpu_custom_call.1} parent=11 // pred_fallthru
          _
        // Predicated region
        $region41: #{tpu_custom_call.1} parent=11 // pred_check
          %p391 = pneg %p299
        $region42: #{tpu_custom_call.1} parent=11 // pred_check_branch
          %393 = sbr.rel (%p391) target = $region44
        $region43: #{tpu_custom_call.1} parent=11 // pred_region
          _
        $region44: #{tpu_custom_call.1} parent=11 // pred_fallthru
          _
      $region12: #{tpu_custom_call.1} parent=5 // pred_fallthru
        _
      %p394 = scmp.lt.s32.totalorder %s28, 2
      // Predicated region
      $region45: #{tpu_custom_call.1} parent=5 // pred_check
        %p395 = pneg %p394
      $region46: #{tpu_custom_call.1} parent=5 // pred_check_branch
        %397 = sbr.rel (%p395) target = $region48
      $region47: #{tpu_custom_call.1} parent=5 // pred_region
        // Predicated region
        $region49: #{tpu_custom_call.1} parent=47 // pred_check
          %p398 = pneg %p69
        $region50: #{tpu_custom_call.1} parent=47 // pred_check_branch
          %400 = sbr.rel (%p398) target = $region52
        $region51: #{tpu_custom_call.1} parent=47 // pred_region
          %s401 = sand.u32 %s59, 1
          %s402 = scalar_lea.sflag [#allocation7], %s401
          %s403 = sand.u32 %s59, 1
          %s404 = smul.addr %s403, 4
          %s405 = scalar_lea.vmem [#allocation6], %s404
          %s407 = ssub.s32 64, 64
          %408 = vsyncadd %s402, %s407
          %s409 = sadd.s32 %s36, %s35
          %s410 = smul.addr %s409, 64
          %s411 = scalar_lea.hbm %s0, %s410
          %s413 = sshll.u32 %s405, 4
          %s414 = int_to_ptr.vmem [resolvable:$true] %s413
          %416 = dma.hbm_to_vmem [thread:$0]  %s411, 64, %s414, %s402
        $region52: #{tpu_custom_call.1} parent=47 // pred_fallthru
          _
        // Predicated region
        $region53: #{tpu_custom_call.1} parent=47 // pred_check
          %p417 = pneg %p97
        $region54: #{tpu_custom_call.1} parent=47 // pred_check_branch
          %419 = sbr.rel (%p417) target = $region56
        $region55: #{tpu_custom_call.1} parent=47 // pred_region
          %s420 = sand.u32 %s28, 1
          %s421 = scalar_lea.sflag [#allocation10], %s420
          %s422 = sand.u32 %s87, 1
          %s423 = smul.addr %s422, 4
          %s424 = scalar_lea.vmem [#allocation9], %s423
          %s426 = ssub.s32 64, 64
          %427 = vsyncadd %s421, %s426
          %s428 = sadd.s32 %s37, %s35
          %s429 = smul.addr %s428, 64
          %s430 = scalar_lea.hbm %s1, %s429
          %s432 = sshll.u32 %s424, 4
          %s433 = int_to_ptr.vmem [resolvable:$true] %s432
          %435 = dma.hbm_to_vmem [thread:$0]  %s430, 64, %s433, %s421
        $region56: #{tpu_custom_call.1} parent=47 // pred_fallthru
          _
        // Predicated region
        $region57: #{tpu_custom_call.1} parent=47 // pred_check
          %p436 = pneg %p125
        $region58: #{tpu_custom_call.1} parent=47 // pred_check_branch
          %438 = sbr.rel (%p436) target = $region60
        $region59: #{tpu_custom_call.1} parent=47 // pred_region
          %s439 = sand.u32 %s28, 1
          %s440 = scalar_lea.sflag [#allocation10], %s439
          %s441 = sand.u32 %s115, 1
          %s442 = smul.addr %s441, 4
          %s443 = scalar_lea.vmem [#allocation11], %s442
          %s445 = ssub.s32 64, 64
          %446 = vsyncadd %s440, %s445
          %s447 = sadd.s32 %s37, %s35
          %s448 = smul.addr %s447, 64
          %s449 = scalar_lea.hbm %s2, %s448
          %s451 = sshll.u32 %s443, 4
          %s452 = int_to_ptr.vmem [resolvable:$true] %s451
          %454 = dma.hbm_to_vmem [thread:$0]  %s449, 64, %s452, %s440
        $region60: #{tpu_custom_call.1} parent=47 // pred_fallthru
          _
      $region48: #{tpu_custom_call.1} parent=5 // pred_fallthru
        _
      %p455 = scmp.le.s32.totalorder 1, %s28
      %p456 = scmp.lt.s32.totalorder %s28, 3
      %p457 = pnand %p455, %p456
      %p458 = pneg %p457
      // Predicated region
      $region61: #{tpu_custom_call.1} parent=5 // pred_check
        _
      $region62: #{tpu_custom_call.1} parent=5 // pred_check_branch
        %460 = sbr.rel (%p457) target = $region64
      $region63: #{tpu_custom_call.1} parent=5 // pred_region
        %s461 = ssub.s32 %s28, 1
        %s462 = sand.u32 %s62, 1
        %s463 = scalar_lea.sflag [#allocation7], %s462
        %s464 = sand.u32 %s62, 1
        %s465 = smul.addr %s464, 4
        %s466 = scalar_lea.vmem [#allocation6], %s465
        // Predicated region
        $region65: #{tpu_custom_call.1} parent=63 // pred_check
          %p467 = pneg %p75
        $region66: #{tpu_custom_call.1} parent=63 // pred_check_branch
          %469 = sbr.rel (%p467) target = $region68
        $region67: #{tpu_custom_call.1} parent=63 // pred_region
          %470 = dma.done %s463, 64
        $region68: #{tpu_custom_call.1} parent=63 // pred_fallthru
          _
        %s471 = sand.u32 %s33, 1
        %s472 = scalar_lea.sflag [#allocation10], %s471
        %s473 = sand.u32 %s90, 1
        %s474 = smul.addr %s473, 4
        %s475 = scalar_lea.vmem [#allocation9], %s474
        // Predicated region
        $region69: #{tpu_custom_call.1} parent=63 // pred_check
          %p476 = pneg %p103
        $region70: #{tpu_custom_call.1} parent=63 // pred_check_branch
          %478 = sbr.rel (%p476) target = $region72
        $region71: #{tpu_custom_call.1} parent=63 // pred_region
          %479 = dma.done %s472, 64
        $region72: #{tpu_custom_call.1} parent=63 // pred_fallthru
          _
        %s480 = sand.u32 %s33, 1
        %s481 = scalar_lea.sflag [#allocation10], %s480
        %s482 = sand.u32 %s118, 1
        %s483 = smul.addr %s482, 4
        %s484 = scalar_lea.vmem [#allocation11], %s483
        // Predicated region
        $region73: #{tpu_custom_call.1} parent=63 // pred_check
          %p485 = pneg %p131
        $region74: #{tpu_custom_call.1} parent=63 // pred_check_branch
          %487 = sbr.rel (%p485) target = $region76
        $region75: #{tpu_custom_call.1} parent=63 // pred_region
          %488 = dma.done %s481, 64
        $region76: #{tpu_custom_call.1} parent=63 // pred_fallthru
          _
        // Predicated region
        $region77: #{tpu_custom_call.1} parent=63 // pred_check
          %p489 = pneg %p152
        $region78: #{tpu_custom_call.1} parent=63 // pred_check_branch
          %491 = sbr.rel (%p489) target = $region80
        $region79: #{tpu_custom_call.1} parent=63 // pred_region
          %492 = dma.done [#allocation13], 256
        $region80: #{tpu_custom_call.1} parent=63 // pred_fallthru
          _
        // Predicated region
        $region81: #{tpu_custom_call.1} parent=63 // pred_check
          %p493 = pneg %p236
        $region82: #{tpu_custom_call.1} parent=63 // pred_check_branch
          %495 = sbr.rel (%p493) target = $region84
        $region83: #{tpu_custom_call.1} parent=63 // pred_region
          %496 = dma.done [#allocation13], 256
        $region84: #{tpu_custom_call.1} parent=63 // pred_fallthru
          _
        // Predicated region
        $region85: #{tpu_custom_call.1} parent=63 // pred_check
          %p497 = pneg %p257
        $region86: #{tpu_custom_call.1} parent=63 // pred_check_branch
          %499 = sbr.rel (%p497) target = $region88
        $region87: #{tpu_custom_call.1} parent=63 // pred_region
          %500 = dma.done [#allocation16], 16
        $region88: #{tpu_custom_call.1} parent=63 // pred_fallthru
          _
        %s501 = sand.u32 %s62, 1
        %s502 = scalar_lea.sflag [#allocation7], %s501
        %s503 = sand.u32 %s62, 1
        %s504 = smul.addr %s503, 4
        %s505 = scalar_lea.vmem [#allocation6], %s504
        %p506 = pneg %p75
        %p507 = pneg %p72
        %s508 = sand.u32 %s33, 1
        %s509 = scalar_lea.sflag [#allocation10], %s508
        %s510 = sand.u32 %s90, 1
        %s511 = smul.addr %s510, 4
        %s512 = scalar_lea.vmem [#allocation9], %s511
        %p513 = pneg %p103
        %p514 = pneg %p100
        %s515 = sand.u32 %s33, 1
        %s516 = scalar_lea.sflag [#allocation10], %s515
        %s517 = sand.u32 %s118, 1
        %s518 = smul.addr %s517, 4
        %s519 = scalar_lea.vmem [#allocation11], %s518
        %p520 = pneg %p131
        %p521 = pneg %p128
        %p522 = pneg %p152
        %p523 = pneg %p149
        %p524 = pneg %p173
        %p525 = pneg %p170
        %p526 = pneg %p194
        %p527 = pneg %p191
        %p528 = pneg %p215
        %p529 = pneg %p212
        %p530 = pneg %p236
        %p531 = pneg %p233
        %p532 = pneg %p257
        %p533 = pneg %p254
        %p534 = pneg %p278
        %p535 = pneg %p275
        %p536 = pneg %p299
        %p537 = pneg %p296
        %p538 = pneg %p327
        %p539 = pneg %p324
        %s540 = sand.u32 %s314, 1
        %s541 = scalar_lea.sflag [#allocation8], %s540
        %s542 = sand.u32 %s314, 1
        %s543 = smul.addr %s542, 8
        %s544 = scalar_lea.vmem [#allocation17], %s543
        %p546 = scmp.eq.s32.totalorder %s40, 0
        // Predicated region
        $region89: #{tpu_custom_call.1} parent=63 // pred_check
          %p547 = pneg %p546
        $region90: #{tpu_custom_call.1} parent=63 // pred_check_branch
          %549 = sbr.rel (%p547) target = $region92
        $region91: #{tpu_custom_call.1} parent=63 // pred_region
          %v550 = vld [vmem:[%s466] sm:$0xf]
          %v551 = vld [vmem:[#allocation12] sm:$0xf]
          %v552 = vld [vmem:[#allocation12 + $0x4] sm:$0xf]
          %v553 = vld [vmem:[#allocation12 + $0x8] sm:$0xf]
          %v554 = vld [vmem:[#allocation12 + $0xc] sm:$0xf]
          %v555 = vld [vmem:[%s4] sm:$0x1]
          %v557 = vlaneseq
          %v558 = vshrl.u32 %v557, 7
          %v559 = vsub.s32 0, %v558
          %v560 = vrot.slane %v555, %v559
          %v566 = vunpack.c.l.b16 %v551
          %v567 = vunpack.c.l.b16 %v552
          %v568 = vunpack.c.l.b16 %v553
          %v569 = vunpack.c.l.b16 %v554
          %v570 = vpack.c.b16 %v567, %v566
          %v571 = vpack.c.b16 %v569, %v568
          %vm574 = vcmask 261120
          %v576 = vsel %vm574, %v550, 0
          %578 = vmatprep.subr.bf16.mxu0 0
          %579 = vmatpush1.bf16.msra.mxu0 %v570
          %580 = vmatprep.subr.bf16.mxu0 0
          %581 = vmatpush1.bf16.msra.mxu0 %v571
          %582 = vmatprep.subr.bf16.mxu0 0
          %583 = vmatpush1.bf16.msra.mxu0 0
          %584 = vmatprep.subr.bf16.mxu0 0
          %585 = vmatpush1.bf16.msra.mxu0 0
          %586 = vmatprep.subr.bf16.mxu0 0
          %587 = vmatpush1.bf16.msra.mxu0 0
          %588 = vmatprep.subr.bf16.mxu0 0
          %589 = vmatpush1.bf16.msra.mxu0 0
          %590 = vmatprep.subr.bf16.mxu0 0
          %591 = vmatpush1.bf16.msra.mxu0 0
          %592 = vmatprep.subr.bf16.mxu0 0
          %593 = vmatpush1.bf16.msra.mxu0 0
          %594 = vmatprep.subr.bf16.mxu0 0
          %595 = vmatpush1.bf16.msra.mxu0 0
          %596 = vmatprep.subr.bf16.mxu0 0
          %597 = vmatpush1.bf16.msra.mxu0 0
          %598 = vmatprep.subr.bf16.mxu0 0
          %599 = vmatpush1.bf16.msra.mxu0 0
          %600 = vmatprep.subr.bf16.mxu0 0
          %601 = vmatpush1.bf16.msra.mxu0 0
          %602 = vmatprep.subr.bf16.mxu0 0
          %603 = vmatpush1.bf16.msra.mxu0 0
          %604 = vmatprep.subr.bf16.mxu0 0
          %605 = vmatpush1.bf16.msra.mxu0 0
          %606 = vmatprep.subr.bf16.mxu0 0
          %607 = vmatpush1.bf16.msra.mxu0 0
          %608 = vmatprep.subr.bf16.mxu0 0
          %609 = vmatpush1.bf16.msra.mxu0 0
          %610 = vmatprep.mubr.bf16.mxu0 0
          %611 = vmatmul.mubr.bf16.gmra.mrb[0].mxu0 %v576
          %v612 = vpop.f32.mrb[0].mxu0
          %v613 = vadd.f32 %v560, %v612
          %v614 = vpop.f32.mrb[0].mxu0
          %v615 = vpop.f32.mrb[0].mxu0
          %v616 = vpop.f32.mrb[0].mxu0
          %617 = vdwg.mxu0
          %v618 = vmul.f32 %v613, 0.35355338
          %v619 = vpack.c.bf16 %v618, %v618
          %621 = vrot.lane.b32.xlu0 %v619, 120
          %v622 = vpop.permute.xlu0 %621
          %623 = vrot.lane.b32.xlu0 %v619, 112
          %v624 = vpop.permute.xlu0 %623
          %625 = vrot.lane.b32.xlu0 %v619, 104
          %v626 = vpop.permute.xlu0 %625
          %v628 = vunpack.c.l.s4 1983009808
          %v629 = vunpack.c.0.s8 %v628
          %v630 = vlaneseq
          %v631 = vshrl.u32 %v630, 7
          %v632 = vsub.s32 %v629, %v631
          %v633 = vrot.slane %v619, %v632
          %v636 = vunpack.c.l.s4 1983009808
          %v637 = vunpack.c.0.s8 %v636
          %v638 = vlaneseq
          %v639 = vshrl.u32 %v638, 7
          %v640 = vsub.s32 %v637, %v639
          %v641 = vrot.slane %v624, %v640
          %v642 = vcombine.low %v633, %v641
          %v643 = vcombine.high %v633, %v641
          %v645 = vunpack.c.l.s4 1934713408
          %v646 = vunpack.c.0.s8 %v645
          %v647 = vlaneseq
          %v648 = vshrl.u32 %v647, 7
          %v649 = vsub.s32 %v646, %v648
          %v650 = vrot.slane %v642, %v649
          %v652 = vunpack.c.l.s4 1934713408
          %v653 = vunpack.c.0.s8 %v652
          %v654 = vlaneseq
          %v655 = vshrl.u32 %v654, 7
          %v656 = vsub.s32 %v653, %v655
          %v657 = vrot.slane %v643, %v656
          %v658 = vcombine.high %v650, 0
          %v659 = vcombine.high %v657, 0
          %v662 = vunpack.c.l.s4 1983009808
          %v663 = vunpack.c.0.s8 %v662
          %v664 = vlaneseq
          %v665 = vshrl.u32 %v664, 7
          %v666 = vsub.s32 %v663, %v665
          %v667 = vrot.slane %v622, %v666
          %v670 = vunpack.c.l.s4 1983009808
          %v671 = vunpack.c.0.s8 %v670
          %v672 = vlaneseq
          %v673 = vshrl.u32 %v672, 7
          %v674 = vsub.s32 %v671, %v673
          %v675 = vrot.slane %v626, %v674
          %v676 = vcombine.low %v667, %v675
          %v677 = vcombine.high %v667, %v675
          %v679 = vunpack.c.l.s4 1934713408
          %v680 = vunpack.c.0.s8 %v679
          %v681 = vlaneseq
          %v682 = vshrl.u32 %v681, 7
          %v683 = vsub.s32 %v680, %v682
          %v684 = vrot.slane %v676, %v683
          %v686 = vunpack.c.l.s4 1934713408
          %v687 = vunpack.c.0.s8 %v686
          %v688 = vlaneseq
          %v689 = vshrl.u32 %v688, 7
          %v690 = vsub.s32 %v687, %v689
          %v691 = vrot.slane %v677, %v690
          %v692 = vcombine.high %v684, 0
          %v693 = vcombine.high %v691, 0
          %v696 = vpack.i.b16 %v684, %v650
          %v698 = vshrl.u32 %v650, 16
          %v699 = vshrl.u32 %v684, 16
          %v700 = vpack.i.b16 %v699, %v698
          %v704 = vpack.i.b16 %v692, %v658
          %v706 = vshrl.u32 %v658, 16
          %v707 = vshrl.u32 %v692, 16
          %v708 = vpack.i.b16 %v707, %v706
          %v712 = vpack.i.b16 %v691, %v657
          %v714 = vshrl.u32 %v657, 16
          %v715 = vshrl.u32 %v691, 16
          %v716 = vpack.i.b16 %v715, %v714
          %v720 = vpack.i.b16 %v693, %v659
          %v722 = vshrl.u32 %v659, 16
          %v723 = vshrl.u32 %v693, 16
          %v724 = vpack.i.b16 %v723, %v722
          %v726 = vcombine.low %v696, %v712
          %v728 = vunpack.c.l.s4 1983009808
          %v729 = vunpack.c.0.s8 %v728
          %v730 = vlaneseq
          %v731 = vshrl.u32 %v730, 7
          %v732 = vsub.s32 %v729, %v731
          %v733 = vrot.slane %v726, %v732
          %v734 = vcombine.low %v704, %v720
          %v736 = vunpack.c.l.s4 1983009808
          %v737 = vunpack.c.0.s8 %v736
          %v738 = vlaneseq
          %v739 = vshrl.u32 %v738, 7
          %v740 = vsub.s32 %v737, %v739
          %v741 = vrot.slane %v734, %v740
          %v742 = vcombine.low %v733, %v741
          %v744 = vunpack.c.l.s4 1934713408
          %v745 = vunpack.c.0.s8 %v744
          %v746 = vlaneseq
          %v747 = vshrl.u32 %v746, 7
          %v748 = vsub.s32 %v745, %v747
          %v749 = vrot.slane %v742, %v748
          %v750 = vcombine.high %v749, 0
          %v751 = vcombine.low %v700, %v716
          %v753 = vunpack.c.l.s4 1983009808
          %v754 = vunpack.c.0.s8 %v753
          %v755 = vlaneseq
          %v756 = vshrl.u32 %v755, 7
          %v757 = vsub.s32 %v754, %v756
          %v758 = vrot.slane %v751, %v757
          %v759 = vcombine.low %v708, %v724
          %v761 = vunpack.c.l.s4 1983009808
          %v762 = vunpack.c.0.s8 %v761
          %v763 = vlaneseq
          %v764 = vshrl.u32 %v763, 7
          %v765 = vsub.s32 %v762, %v764
          %v766 = vrot.slane %v759, %v765
          %v767 = vcombine.low %v758, %v766
          %v769 = vunpack.c.l.s4 1934713408
          %v770 = vunpack.c.0.s8 %v769
          %v771 = vlaneseq
          %v772 = vshrl.u32 %v771, 7
          %v773 = vsub.s32 %v770, %v772
          %v774 = vrot.slane %v767, %v773
          %v775 = vcombine.high %v774, 0
          %v778 = vpack.i.b16 %v774, %v749
          %v780 = vshrl.u32 %v749, 16
          %v781 = vshrl.u32 %v774, 16
          %v782 = vpack.i.b16 %v781, %v780
          %v786 = vpack.i.b16 %v775, %v750
          %v788 = vshrl.u32 %v750, 16
          %v789 = vshrl.u32 %v775, 16
          %v790 = vpack.i.b16 %v789, %v788
          %vm792 = vcmask 60416
          %793 = vst.msk [vmem:[#allocation2] sm:$0xf] %vm792, %v778
          %794 = vst.msk [vmem:[#allocation2 + $0x4] sm:$0xf] %vm792, %v782
          %795 = vst.msk [vmem:[#allocation2 + $0x8] sm:$0xf] %vm792, %v786
          %796 = vst.msk [vmem:[#allocation2 + $0xc] sm:$0xf] %vm792, %v790
          %vm797 = vcmask 7168
          %798 = vst.msk [vmem:[#allocation3] sm:$0xff] %vm797, -inf
          %799 = vst.msk [vmem:[#allocation3 + $0x8] sm:$0xff] %vm797, -inf
          %800 = vst.msk [vmem:[#allocation3 + $0x10] sm:$0xff] %vm797, -inf
          %801 = vst.msk [vmem:[#allocation3 + $0x18] sm:$0xff] %vm797, -inf
          %802 = vst.msk [vmem:[#allocation4] sm:$0xff] %vm797, 0.0
          %803 = vst.msk [vmem:[#allocation4 + $0x8] sm:$0xff] %vm797, 0.0
          %804 = vst.msk [vmem:[#allocation4 + $0x10] sm:$0xff] %vm797, 0.0
          %805 = vst.msk [vmem:[#allocation4 + $0x18] sm:$0xff] %vm797, 0.0
          %vm806 = vcmask 64512
          %807 = vst.msk [vmem:[#allocation5] sm:$0xff] %vm806, 0.0
          %808 = vst.msk [vmem:[#allocation5 + $0x8] sm:$0xff] %vm806, 0.0
          %809 = vst.msk [vmem:[#allocation5 + $0x10] sm:$0xff] %vm806, 0.0
          %810 = vst.msk [vmem:[#allocation5 + $0x18] sm:$0xff] %vm806, 0.0
        $region92: #{tpu_custom_call.1} parent=63 // pred_fallthru
          _
        %v811 = vld [vmem:[%s475] sm:$0xf]
        %v812 = vld [vmem:[%s5] sm:$0xf]
        %v813 = vld [vmem:[%s5 + $0x4] sm:$0xf]
        %v814 = vld [vmem:[%s5 + $0x8] sm:$0xf]
        %v815 = vld [vmem:[%s5 + $0xc] sm:$0xf]
        %v816 = vld [vmem:[%s6] sm:$0x1]
        %v818 = vlaneseq
        %v819 = vshrl.u32 %v818, 7
        %v820 = vsub.s32 0, %v819
        %v821 = vrot.slane %v816, %v820
        %v827 = vunpack.c.l.b16 %v812
        %v828 = vunpack.c.l.b16 %v813
        %v829 = vunpack.c.l.b16 %v814
        %v830 = vunpack.c.l.b16 %v815
        %v831 = vpack.c.b16 %v828, %v827
        %v832 = vpack.c.b16 %v830, %v829
        %vm835 = vcmask 261120
        %v837 = vsel %vm835, %v811, 0
        %839 = vmatprep.subr.bf16.mxu0 0
        %840 = vmatpush1.bf16.msra.mxu0 %v831
        %841 = vmatprep.subr.bf16.mxu0 0
        %842 = vmatpush1.bf16.msra.mxu0 %v832
        %843 = vmatprep.subr.bf16.mxu0 0
        %844 = vmatpush1.bf16.msra.mxu0 0
        %845 = vmatprep.subr.bf16.mxu0 0
        %846 = vmatpush1.bf16.msra.mxu0 0
        %847 = vmatprep.subr.bf16.mxu0 0
        %848 = vmatpush1.bf16.msra.mxu0 0
        %849 = vmatprep.subr.bf16.mxu0 0
        %850 = vmatpush1.bf16.msra.mxu0 0
        %851 = vmatprep.subr.bf16.mxu0 0
        %852 = vmatpush1.bf16.msra.mxu0 0
        %853 = vmatprep.subr.bf16.mxu0 0
        %854 = vmatpush1.bf16.msra.mxu0 0
        %855 = vmatprep.subr.bf16.mxu0 0
        %856 = vmatpush1.bf16.msra.mxu0 0
        %857 = vmatprep.subr.bf16.mxu0 0
        %858 = vmatpush1.bf16.msra.mxu0 0
        %859 = vmatprep.subr.bf16.mxu0 0
        %860 = vmatpush1.bf16.msra.mxu0 0
        %861 = vmatprep.subr.bf16.mxu0 0
        %862 = vmatpush1.bf16.msra.mxu0 0
        %863 = vmatprep.subr.bf16.mxu0 0
        %864 = vmatpush1.bf16.msra.mxu0 0
        %865 = vmatprep.subr.bf16.mxu0 0
        %866 = vmatpush1.bf16.msra.mxu0 0
        %867 = vmatprep.subr.bf16.mxu0 0
        %868 = vmatpush1.bf16.msra.mxu0 0
        %869 = vmatprep.subr.bf16.mxu0 0
        %870 = vmatpush1.bf16.msra.mxu0 0
        %871 = vmatprep.mubr.bf16.mxu0 0
        %872 = vmatmul.mubr.bf16.gmra.mrb[0].mxu0 %v837
        %v873 = vpop.f32.mrb[0].mxu0
        %v874 = vadd.f32 %v821, %v873
        %v875 = vpop.f32.mrb[0].mxu0
        %v876 = vpop.f32.mrb[0].mxu0
        %v877 = vpop.f32.mrb[0].mxu0
        %878 = vdwg.mxu0
        %v879 = vpack.c.bf16 %v874, %v874
        %v880 = vld [vmem:[%s484] sm:$0xf]
        %v881 = vld [vmem:[#allocation14] sm:$0xf]
        %v882 = vld [vmem:[#allocation14 + $0x4] sm:$0xf]
        %v883 = vld [vmem:[#allocation14 + $0x8] sm:$0xf]
        %v884 = vld [vmem:[#allocation14 + $0xc] sm:$0xf]
        %v885 = vld [vmem:[#allocation15] sm:$0x1]
        %v887 = vlaneseq
        %v888 = vshrl.u32 %v887, 7
        %v889 = vsub.s32 0, %v888
        %v890 = vrot.slane %v885, %v889
        %v896 = vunpack.c.l.b16 %v881
        %v897 = vunpack.c.l.b16 %v882
        %v898 = vunpack.c.l.b16 %v883
        %v899 = vunpack.c.l.b16 %v884
        %v900 = vpack.c.b16 %v897, %v896
        %v901 = vpack.c.b16 %v899, %v898
        %v905 = vsel %vm835, %v880, 0
        %907 = vmatprep.subr.bf16.mxu0 0
        %908 = vmatpush1.bf16.msra.mxu0 %v900
        %909 = vmatprep.subr.bf16.mxu0 0
        %910 = vmatpush1.bf16.msra.mxu0 %v901
        %911 = vmatprep.subr.bf16.mxu0 0
        %912 = vmatpush1.bf16.msra.mxu0 0
        %913 = vmatprep.subr.bf16.mxu0 0
        %914 = vmatpush1.bf16.msra.mxu0 0
        %915 = vmatprep.subr.bf16.mxu0 0
        %916 = vmatpush1.bf16.msra.mxu0 0
        %917 = vmatprep.subr.bf16.mxu0 0
        %918 = vmatpush1.bf16.msra.mxu0 0
        %919 = vmatprep.subr.bf16.mxu0 0
        %920 = vmatpush1.bf16.msra.mxu0 0
        %921 = vmatprep.subr.bf16.mxu0 0
        %922 = vmatpush1.bf16.msra.mxu0 0
        %923 = vmatprep.subr.bf16.mxu0 0
        %924 = vmatpush1.bf16.msra.mxu0 0
        %925 = vmatprep.subr.bf16.mxu0 0
        %926 = vmatpush1.bf16.msra.mxu0 0
        %927 = vmatprep.subr.bf16.mxu0 0
        %928 = vmatpush1.bf16.msra.mxu0 0
        %929 = vmatprep.subr.bf16.mxu0 0
        %930 = vmatpush1.bf16.msra.mxu0 0
        %931 = vmatprep.subr.bf16.mxu0 0
        %932 = vmatpush1.bf16.msra.mxu0 0
        %933 = vmatprep.subr.bf16.mxu0 0
        %934 = vmatpush1.bf16.msra.mxu0 0
        %935 = vmatprep.subr.bf16.mxu0 0
        %936 = vmatpush1.bf16.msra.mxu0 0
        %937 = vmatprep.subr.bf16.mxu0 0
        %938 = vmatpush1.bf16.msra.mxu0 0
        %939 = vmatprep.mubr.bf16.mxu0 0
        %940 = vmatmul.mubr.bf16.gmra.mrb[0].mxu0 %v905
        %v941 = vpop.f32.mrb[0].mxu0
        %v942 = vadd.f32 %v890, %v941
        %v943 = vpop.f32.mrb[0].mxu0
        %v944 = vpop.f32.mrb[0].mxu0
        %v945 = vpop.f32.mrb[0].mxu0
        %946 = vdwg.mxu0
        %v947 = vpack.c.bf16 %v942, %v942
        %949 = vrot.lane.b32.xlu0 %v879, 120
        %v950 = vpop.permute.xlu0 %949
        %951 = vrot.lane.b32.xlu0 %v879, 112
        %v952 = vpop.permute.xlu0 %951
        %953 = vrot.lane.b32.xlu0 %v879, 104
        %v954 = vpop.permute.xlu0 %953
        %v956 = vunpack.c.l.s4 1983009808
        %v957 = vunpack.c.0.s8 %v956
        %v958 = vlaneseq
        %v959 = vshrl.u32 %v958, 7
        %v960 = vsub.s32 %v957, %v959
        %v961 = vrot.slane %v879, %v960
        %v964 = vunpack.c.l.s4 1983009808
        %v965 = vunpack.c.0.s8 %v964
        %v966 = vlaneseq
        %v967 = vshrl.u32 %v966, 7
        %v968 = vsub.s32 %v965, %v967
        %v969 = vrot.slane %v952, %v968
        %v970 = vcombine.low %v961, %v969
        %v971 = vcombine.high %v961, %v969
        %v973 = vunpack.c.l.s4 1934713408
        %v974 = vunpack.c.0.s8 %v973
        %v975 = vlaneseq
        %v976 = vshrl.u32 %v975, 7
        %v977 = vsub.s32 %v974, %v976
        %v978 = vrot.slane %v970, %v977
        %v980 = vunpack.c.l.s4 1934713408
        %v981 = vunpack.c.0.s8 %v980
        %v982 = vlaneseq
        %v983 = vshrl.u32 %v982, 7
        %v984 = vsub.s32 %v981, %v983
        %v985 = vrot.slane %v971, %v984
        %v986 = vcombine.high %v978, 0
        %v987 = vcombine.high %v985, 0
        %v990 = vunpack.c.l.s4 1983009808
        %v991 = vunpack.c.0.s8 %v990
        %v992 = vlaneseq
        %v993 = vshrl.u32 %v992, 7
        %v994 = vsub.s32 %v991, %v993
        %v995 = vrot.slane %v950, %v994
        %v998 = vunpack.c.l.s4 1983009808
        %v999 = vunpack.c.0.s8 %v998
        %v1000 = vlaneseq
        %v1001 = vshrl.u32 %v1000, 7
        %v1002 = vsub.s32 %v999, %v1001
        %v1003 = vrot.slane %v954, %v1002
        %v1004 = vcombine.low %v995, %v1003
        %v1005 = vcombine.high %v995, %v1003
        %v1007 = vunpack.c.l.s4 1934713408
        %v1008 = vunpack.c.0.s8 %v1007
        %v1009 = vlaneseq
        %v1010 = vshrl.u32 %v1009, 7
        %v1011 = vsub.s32 %v1008, %v1010
        %v1012 = vrot.slane %v1004, %v1011
        %v1014 = vunpack.c.l.s4 1934713408
        %v1015 = vunpack.c.0.s8 %v1014
        %v1016 = vlaneseq
        %v1017 = vshrl.u32 %v1016, 7
        %v1018 = vsub.s32 %v1015, %v1017
        %v1019 = vrot.slane %v1005, %v1018
        %v1020 = vcombine.high %v1012, 0
        %v1021 = vcombine.high %v1019, 0
        %v1024 = vpack.i.b16 %v1012, %v978
        %v1026 = vshrl.u32 %v978, 16
        %v1027 = vshrl.u32 %v1012, 16
        %v1028 = vpack.i.b16 %v1027, %v1026
        %v1032 = vpack.i.b16 %v1020, %v986
        %v1034 = vshrl.u32 %v986, 16
        %v1035 = vshrl.u32 %v1020, 16
        %v1036 = vpack.i.b16 %v1035, %v1034
        %v1040 = vpack.i.b16 %v1019, %v985
        %v1042 = vshrl.u32 %v985, 16
        %v1043 = vshrl.u32 %v1019, 16
        %v1044 = vpack.i.b16 %v1043, %v1042
        %v1048 = vpack.i.b16 %v1021, %v987
        %v1050 = vshrl.u32 %v987, 16
        %v1051 = vshrl.u32 %v1021, 16
        %v1052 = vpack.i.b16 %v1051, %v1050
        %v1054 = vcombine.low %v1024, %v1040
        %v1056 = vunpack.c.l.s4 1983009808
        %v1057 = vunpack.c.0.s8 %v1056
        %v1058 = vlaneseq
        %v1059 = vshrl.u32 %v1058, 7
        %v1060 = vsub.s32 %v1057, %v1059
        %v1061 = vrot.slane %v1054, %v1060
        %v1062 = vcombine.low %v1032, %v1048
        %v1064 = vunpack.c.l.s4 1983009808
        %v1065 = vunpack.c.0.s8 %v1064
        %v1066 = vlaneseq
        %v1067 = vshrl.u32 %v1066, 7
        %v1068 = vsub.s32 %v1065, %v1067
        %v1069 = vrot.slane %v1062, %v1068
        %v1070 = vcombine.low %v1061, %v1069
        %v1072 = vunpack.c.l.s4 1934713408
        %v1073 = vunpack.c.0.s8 %v1072
        %v1074 = vlaneseq
        %v1075 = vshrl.u32 %v1074, 7
        %v1076 = vsub.s32 %v1073, %v1075
        %v1077 = vrot.slane %v1070, %v1076
        %v1078 = vcombine.high %v1077, 0
        %v1079 = vcombine.low %v1028, %v1044
        %v1081 = vunpack.c.l.s4 1983009808
        %v1082 = vunpack.c.0.s8 %v1081
        %v1083 = vlaneseq
        %v1084 = vshrl.u32 %v1083, 7
        %v1085 = vsub.s32 %v1082, %v1084
        %v1086 = vrot.slane %v1079, %v1085
        %v1087 = vcombine.low %v1036, %v1052
        %v1089 = vunpack.c.l.s4 1983009808
        %v1090 = vunpack.c.0.s8 %v1089
        %v1091 = vlaneseq
        %v1092 = vshrl.u32 %v1091, 7
        %v1093 = vsub.s32 %v1090, %v1092
        %v1094 = vrot.slane %v1087, %v1093
        %v1095 = vcombine.low %v1086, %v1094
        %v1097 = vunpack.c.l.s4 1934713408
        %v1098 = vunpack.c.0.s8 %v1097
        %v1099 = vlaneseq
        %v1100 = vshrl.u32 %v1099, 7
        %v1101 = vsub.s32 %v1098, %v1100
        %v1102 = vrot.slane %v1095, %v1101
        %v1103 = vcombine.high %v1102, 0
        %v1106 = vpack.i.b16 %v1102, %v1077
        %v1107 = vshrl.u32 %v1077, 16
        %v1108 = vshrl.u32 %v1102, 16
        %v1109 = vpack.i.b16 %v1108, %v1107
        %v1112 = vpack.i.b16 %v1103, %v1078
        %v1113 = vshrl.u32 %v1078, 16
        %v1114 = vshrl.u32 %v1103, 16
        %v1115 = vpack.i.b16 %v1114, %v1113
        %1117 = vrot.lane.b32.xlu0 %v947, 120
        %v1118 = vpop.permute.xlu0 %1117
        %1119 = vrot.lane.b32.xlu0 %v947, 112
        %v1120 = vpop.permute.xlu0 %1119
        %1121 = vrot.lane.b32.xlu0 %v947, 104
        %v1122 = vpop.permute.xlu0 %1121
        %v1124 = vunpack.c.l.s4 1983009808
        %v1125 = vunpack.c.0.s8 %v1124
        %v1126 = vlaneseq
        %v1127 = vshrl.u32 %v1126, 7
        %v1128 = vsub.s32 %v1125, %v1127
        %v1129 = vrot.slane %v947, %v1128
        %v1132 = vunpack.c.l.s4 1983009808
        %v1133 = vunpack.c.0.s8 %v1132
        %v1134 = vlaneseq
        %v1135 = vshrl.u32 %v1134, 7
        %v1136 = vsub.s32 %v1133, %v1135
        %v1137 = vrot.slane %v1120, %v1136
        %v1138 = vcombine.low %v1129, %v1137
        %v1139 = vcombine.high %v1129, %v1137
        %v1141 = vunpack.c.l.s4 1934713408
        %v1142 = vunpack.c.0.s8 %v1141
        %v1143 = vlaneseq
        %v1144 = vshrl.u32 %v1143, 7
        %v1145 = vsub.s32 %v1142, %v1144
        %v1146 = vrot.slane %v1138, %v1145
        %v1148 = vunpack.c.l.s4 1934713408
        %v1149 = vunpack.c.0.s8 %v1148
        %v1150 = vlaneseq
        %v1151 = vshrl.u32 %v1150, 7
        %v1152 = vsub.s32 %v1149, %v1151
        %v1153 = vrot.slane %v1139, %v1152
        %v1154 = vcombine.high %v1146, 0
        %v1155 = vcombine.high %v1153, 0
        %v1158 = vunpack.c.l.s4 1983009808
        %v1159 = vunpack.c.0.s8 %v1158
        %v1160 = vlaneseq
        %v1161 = vshrl.u32 %v1160, 7
        %v1162 = vsub.s32 %v1159, %v1161
        %v1163 = vrot.slane %v1118, %v1162
        %v1166 = vunpack.c.l.s4 1983009808
        %v1167 = vunpack.c.0.s8 %v1166
        %v1168 = vlaneseq
        %v1169 = vshrl.u32 %v1168, 7
        %v1170 = vsub.s32 %v1167, %v1169
        %v1171 = vrot.slane %v1122, %v1170
        %v1172 = vcombine.low %v1163, %v1171
        %v1173 = vcombine.high %v1163, %v1171
        %v1175 = vunpack.c.l.s4 1934713408
        %v1176 = vunpack.c.0.s8 %v1175
        %v1177 = vlaneseq
        %v1178 = vshrl.u32 %v1177, 7
        %v1179 = vsub.s32 %v1176, %v1178
        %v1180 = vrot.slane %v1172, %v1179
        %v1182 = vunpack.c.l.s4 1934713408
        %v1183 = vunpack.c.0.s8 %v1182
        %v1184 = vlaneseq
        %v1185 = vshrl.u32 %v1184, 7
        %v1186 = vsub.s32 %v1183, %v1185
        %v1187 = vrot.slane %v1173, %v1186
        %v1188 = vcombine.high %v1180, 0
        %v1189 = vcombine.high %v1187, 0
        %v1192 = vpack.i.b16 %v1180, %v1146
        %v1194 = vshrl.u32 %v1146, 16
        %v1195 = vshrl.u32 %v1180, 16
        %v1196 = vpack.i.b16 %v1195, %v1194
        %v1200 = vpack.i.b16 %v1188, %v1154
        %v1202 = vshrl.u32 %v1154, 16
        %v1203 = vshrl.u32 %v1188, 16
        %v1204 = vpack.i.b16 %v1203, %v1202
        %v1208 = vpack.i.b16 %v1187, %v1153
        %v1210 = vshrl.u32 %v1153, 16
        %v1211 = vshrl.u32 %v1187, 16
        %v1212 = vpack.i.b16 %v1211, %v1210
        %v1216 = vpack.i.b16 %v1189, %v1155
        %v1218 = vshrl.u32 %v1155, 16
        %v1219 = vshrl.u32 %v1189, 16
        %v1220 = vpack.i.b16 %v1219, %v1218
        %v1222 = vcombine.low %v1192, %v1208
        %v1224 = vunpack.c.l.s4 1983009808
        %v1225 = vunpack.c.0.s8 %v1224
        %v1226 = vlaneseq
        %v1227 = vshrl.u32 %v1226, 7
        %v1228 = vsub.s32 %v1225, %v1227
        %v1229 = vrot.slane %v1222, %v1228
        %v1230 = vcombine.low %v1200, %v1216
        %v1232 = vunpack.c.l.s4 1983009808
        %v1233 = vunpack.c.0.s8 %v1232
        %v1234 = vlaneseq
        %v1235 = vshrl.u32 %v1234, 7
        %v1236 = vsub.s32 %v1233, %v1235
        %v1237 = vrot.slane %v1230, %v1236
        %v1238 = vcombine.low %v1229, %v1237
        %v1240 = vunpack.c.l.s4 1934713408
        %v1241 = vunpack.c.0.s8 %v1240
        %v1242 = vlaneseq
        %v1243 = vshrl.u32 %v1242, 7
        %v1244 = vsub.s32 %v1241, %v1243
        %v1245 = vrot.slane %v1238, %v1244
        %v1246 = vcombine.high %v1245, 0
        %v1247 = vcombine.low %v1196, %v1212
        %v1249 = vunpack.c.l.s4 1983009808
        %v1250 = vunpack.c.0.s8 %v1249
        %v1251 = vlaneseq
        %v1252 = vshrl.u32 %v1251, 7
        %v1253 = vsub.s32 %v1250, %v1252
        %v1254 = vrot.slane %v1247, %v1253
        %v1255 = vcombine.low %v1204, %v1220
        %v1257 = vunpack.c.l.s4 1983009808
        %v1258 = vunpack.c.0.s8 %v1257
        %v1259 = vlaneseq
        %v1260 = vshrl.u32 %v1259, 7
        %v1261 = vsub.s32 %v1258, %v1260
        %v1262 = vrot.slane %v1255, %v1261
        %v1263 = vcombine.low %v1254, %v1262
        %v1265 = vunpack.c.l.s4 1934713408
        %v1266 = vunpack.c.0.s8 %v1265
        %v1267 = vlaneseq
        %v1268 = vshrl.u32 %v1267, 7
        %v1269 = vsub.s32 %v1266, %v1268
        %v1270 = vrot.slane %v1263, %v1269
        %v1271 = vcombine.high %v1270, 0
        %v1274 = vpack.i.b16 %v1270, %v1245
        %v1275 = vshrl.u32 %v1245, 16
        %v1276 = vshrl.u32 %v1270, 16
        %v1277 = vpack.i.b16 %v1276, %v1275
        %v1280 = vpack.i.b16 %v1271, %v1246
        %v1281 = vshrl.u32 %v1246, 16
        %v1282 = vshrl.u32 %v1271, 16
        %v1283 = vpack.i.b16 %v1282, %v1281
        %v1284 = vld [vmem:[#allocation2] sm:$0xf]
        %v1285 = vld [vmem:[#allocation2 + $0x4] sm:$0xf]
        %v1286 = vld [vmem:[#allocation2 + $0x8] sm:$0xf]
        %v1287 = vld [vmem:[#allocation2 + $0xc] sm:$0xf]
        %vm1288 = vcmask 64512
        %v1290 = vsel %vm1288, %v1284, 0
        %v1293 = vsel %vm1288, %v1106, 0
        %1295 = vmatprep.subr.bf16.mxu0 0
        %1296 = vmatpush1.bf16.xpose.msra.mxu0 %v1293
        %1297 = vmatprep.subr.bf16.mxu0 0
        %1298 = vmatpush1.bf16.xpose.msra.mxu0 0
        %1299 = vmatprep.subr.bf16.mxu0 0
        %1300 = vmatpush1.bf16.xpose.msra.mxu0 0
        %1301 = vmatprep.subr.bf16.mxu0 0
        %1302 = vmatpush1.bf16.xpose.msra.mxu0 0
        %1303 = vmatprep.subr.bf16.mxu0 0
        %1304 = vmatpush1.bf16.xpose.msra.mxu0 0
        %1305 = vmatprep.subr.bf16.mxu0 0
        %1306 = vmatpush1.bf16.xpose.msra.mxu0 0
        %1307 = vmatprep.subr.bf16.mxu0 0
        %1308 = vmatpush1.bf16.xpose.msra.mxu0 0
        %1309 = vmatprep.subr.bf16.mxu0 0
        %1310 = vmatpush1.bf16.xpose.msra.mxu0 0
        %1311 = vmatprep.subr.bf16.mxu0 0
        %1312 = vmatpush1.bf16.xpose.msra.mxu0 0
        %1313 = vmatprep.subr.bf16.mxu0 0
        %1314 = vmatpush1.bf16.xpose.msra.mxu0 0
        %1315 = vmatprep.subr.bf16.mxu0 0
        %1316 = vmatpush1.bf16.xpose.msra.mxu0 0
        %1317 = vmatprep.subr.bf16.mxu0 0
        %1318 = vmatpush1.bf16.xpose.msra.mxu0 0
        %1319 = vmatprep.subr.bf16.mxu0 0
        %1320 = vmatpush1.bf16.xpose.msra.mxu0 0
        %1321 = vmatprep.subr.bf16.mxu0 0
        %1322 = vmatpush1.bf16.xpose.msra.mxu0 0
        %1323 = vmatprep.subr.bf16.mxu0 0
        %1324 = vmatpush1.bf16.xpose.msra.mxu0 0
        %1325 = vmatprep.subr.bf16.mxu0 0
        %1326 = vmatpush1.bf16.xpose.msra.mxu0 0
        %1327 = vmatprep.mubr.bf16.mxu0 0
        %1328 = vmatmul.mubr.bf16.gmra.mrb[0].mxu0 %v1290
        %v1329 = vpop.f32.mrb[0].mxu0
        %v1330 = vadd.f32 0.0, %v1329
        %v1331 = vpop.f32.mrb[0].mxu0
        %v1332 = vpop.f32.mrb[0].mxu0
        %v1333 = vpop.f32.mrb[0].mxu0
        %1334 = vdwg.mxu0
        %v1336 = vsel %vm1288, %v1285, 0
        %v1339 = vsel %vm1288, %v1109, 0
        %1341 = vmatprep.subr.bf16.mxu0 0
        %1342 = vmatpush1.bf16.xpose.msra.mxu0 %v1339
        %1343 = vmatprep.subr.bf16.mxu0 0
        %1344 = vmatpush1.bf16.xpose.msra.mxu0 0
        %1345 = vmatprep.subr.bf16.mxu0 0
        %1346 = vmatpush1.bf16.xpose.msra.mxu0 0
        %1347 = vmatprep.subr.bf16.mxu0 0
        %1348 = vmatpush1.bf16.xpose.msra.mxu0 0
        %1349 = vmatprep.subr.bf16.mxu0 0
        %1350 = vmatpush1.bf16.xpose.msra.mxu0 0
        %1351 = vmatprep.subr.bf16.mxu0 0
        %1352 = vmatpush1.bf16.xpose.msra.mxu0 0
        %1353 = vmatprep.subr.bf16.mxu0 0
        %1354 = vmatpush1.bf16.xpose.msra.mxu0 0
        %1355 = vmatprep.subr.bf16.mxu0 0
        %1356 = vmatpush1.bf16.xpose.msra.mxu0 0
        %1357 = vmatprep.subr.bf16.mxu0 0
        %1358 = vmatpush1.bf16.xpose.msra.mxu0 0
        %1359 = vmatprep.subr.bf16.mxu0 0
        %1360 = vmatpush1.bf16.xpose.msra.mxu0 0
        %1361 = vmatprep.subr.bf16.mxu0 0
        %1362 = vmatpush1.bf16.xpose.msra.mxu0 0
        %1363 = vmatprep.subr.bf16.mxu0 0
        %1364 = vmatpush1.bf16.xpose.msra.mxu0 0
        %1365 = vmatprep.subr.bf16.mxu0 0
        %1366 = vmatpush1.bf16.xpose.msra.mxu0 0
        %1367 = vmatprep.subr.bf16.mxu0 0
        %1368 = vmatpush1.bf16.xpose.msra.mxu0 0
        %1369 = vmatprep.subr.bf16.mxu0 0
        %1370 = vmatpush1.bf16.xpose.msra.mxu0 0
        %1371 = vmatprep.subr.bf16.mxu0 0
        %1372 = vmatpush1.bf16.xpose.msra.mxu0 0
        %1373 = vmatprep.mubr.bf16.mxu0 0
        %1374 = vmatmul.mubr.bf16.gmra.mrb[0].mxu0 %v1336
        %v1375 = vpop.f32.mrb[0].mxu0
        %v1376 = vadd.f32 0.0, %v1375
        %v1377 = vpop.f32.mrb[0].mxu0
        %v1378 = vpop.f32.mrb[0].mxu0
        %v1379 = vpop.f32.mrb[0].mxu0
        %1380 = vdwg.mxu0
        %v1382 = vsel %vm1288, %v1286, 0
        %v1385 = vsel %vm1288, %v1112, 0
        %1387 = vmatprep.subr.bf16.mxu0 0
        %1388 = vmatpush1.bf16.xpose.msra.mxu0 %v1385
        %1389 = vmatprep.subr.bf16.mxu0 0
        %1390 = vmatpush1.bf16.xpose.msra.mxu0 0
        %1391 = vmatprep.subr.bf16.mxu0 0
        %1392 = vmatpush1.bf16.xpose.msra.mxu0 0
        %1393 = vmatprep.subr.bf16.mxu0 0
        %1394 = vmatpush1.bf16.xpose.msra.mxu0 0
        %1395 = vmatprep.subr.bf16.mxu0 0
        %1396 = vmatpush1.bf16.xpose.msra.mxu0 0
        %1397 = vmatprep.subr.bf16.mxu0 0
        %1398 = vmatpush1.bf16.xpose.msra.mxu0 0
        %1399 = vmatprep.subr.bf16.mxu0 0
        %1400 = vmatpush1.bf16.xpose.msra.mxu0 0
        %1401 = vmatprep.subr.bf16.mxu0 0
        %1402 = vmatpush1.bf16.xpose.msra.mxu0 0
        %1403 = vmatprep.subr.bf16.mxu0 0
        %1404 = vmatpush1.bf16.xpose.msra.mxu0 0
        %1405 = vmatprep.subr.bf16.mxu0 0
        %1406 = vmatpush1.bf16.xpose.msra.mxu0 0
        %1407 = vmatprep.subr.bf16.mxu0 0
        %1408 = vmatpush1.bf16.xpose.msra.mxu0 0
        %1409 = vmatprep.subr.bf16.mxu0 0
        %1410 = vmatpush1.bf16.xpose.msra.mxu0 0
        %1411 = vmatprep.subr.bf16.mxu0 0
        %1412 = vmatpush1.bf16.xpose.msra.mxu0 0
        %1413 = vmatprep.subr.bf16.mxu0 0
        %1414 = vmatpush1.bf16.xpose.msra.mxu0 0
        %1415 = vmatprep.subr.bf16.mxu0 0
        %1416 = vmatpush1.bf16.xpose.msra.mxu0 0
        %1417 = vmatprep.subr.bf16.mxu0 0
        %1418 = vmatpush1.bf16.xpose.msra.mxu0 0
        %1419 = vmatprep.mubr.bf16.mxu0 0
        %1420 = vmatmul.mubr.bf16.gmra.mrb[0].mxu0 %v1382
        %v1421 = vpop.f32.mrb[0].mxu0
        %v1422 = vadd.f32 0.0, %v1421
        %v1423 = vpop.f32.mrb[0].mxu0
        %v1424 = vpop.f32.mrb[0].mxu0
        %v1425 = vpop.f32.mrb[0].mxu0
        %1426 = vdwg.mxu0
        %v1428 = vsel %vm1288, %v1287, 0
        %v1431 = vsel %vm1288, %v1115, 0
        %1433 = vmatprep.subr.bf16.mxu0 0
        %1434 = vmatpush1.bf16.xpose.msra.mxu0 %v1431
        %1435 = vmatprep.subr.bf16.mxu0 0
        %1436 = vmatpush1.bf16.xpose.msra.mxu0 0
        %1437 = vmatprep.subr.bf16.mxu0 0
        %1438 = vmatpush1.bf16.xpose.msra.mxu0 0
        %1439 = vmatprep.subr.bf16.mxu0 0
        %1440 = vmatpush1.bf16.xpose.msra.mxu0 0
        %1441 = vmatprep.subr.bf16.mxu0 0
        %1442 = vmatpush1.bf16.xpose.msra.mxu0 0
        %1443 = vmatprep.subr.bf16.mxu0 0
        %1444 = vmatpush1.bf16.xpose.msra.mxu0 0
        %1445 = vmatprep.subr.bf16.mxu0 0
        %1446 = vmatpush1.bf16.xpose.msra.mxu0 0
        %1447 = vmatprep.subr.bf16.mxu0 0
        %1448 = vmatpush1.bf16.xpose.msra.mxu0 0
        %1449 = vmatprep.subr.bf16.mxu0 0
        %1450 = vmatpush1.bf16.xpose.msra.mxu0 0
        %1451 = vmatprep.subr.bf16.mxu0 0
        %1452 = vmatpush1.bf16.xpose.msra.mxu0 0
        %1453 = vmatprep.subr.bf16.mxu0 0
        %1454 = vmatpush1.bf16.xpose.msra.mxu0 0
        %1455 = vmatprep.subr.bf16.mxu0 0
        %1456 = vmatpush1.bf16.xpose.msra.mxu0 0
        %1457 = vmatprep.subr.bf16.mxu0 0
        %1458 = vmatpush1.bf16.xpose.msra.mxu0 0
        %1459 = vmatprep.subr.bf16.mxu0 0
        %1460 = vmatpush1.bf16.xpose.msra.mxu0 0
        %1461 = vmatprep.subr.bf16.mxu0 0
        %1462 = vmatpush1.bf16.xpose.msra.mxu0 0
        %1463 = vmatprep.subr.bf16.mxu0 0
        %1464 = vmatpush1.bf16.xpose.msra.mxu0 0
        %1465 = vmatprep.mubr.bf16.mxu0 0
        %1466 = vmatmul.mubr.bf16.gmra.mrb[0].mxu0 %v1428
        %v1467 = vpop.f32.mrb[0].mxu0
        %v1468 = vadd.f32 0.0, %v1467
        %v1469 = vpop.f32.mrb[0].mxu0
        %v1470 = vpop.f32.mrb[0].mxu0
        %v1471 = vpop.f32.mrb[0].mxu0
        %1472 = vdwg.mxu0
        %v1473 = vld [vmem:[#allocation3] sm:$0xff]
        %v1474 = vld [vmem:[#allocation3 + $0x8] sm:$0xff]
        %v1475 = vld [vmem:[#allocation3 + $0x10] sm:$0xff]
        %v1476 = vld [vmem:[#allocation3 + $0x18] sm:$0xff]
        %v1477 = vsel %vm1288, %v1330, -inf
        %1478 = vmax.xlane.f32.xlu0 %v1477
        %v1479 = vpop.xlane.xlu0 %1478
        %v1480 = vsel %vm1288, %v1376, -inf
        %1481 = vmax.xlane.f32.xlu0 %v1480
        %v1482 = vpop.xlane.xlu0 %1481
        %v1483 = vsel %vm1288, %v1422, -inf
        %1484 = vmax.xlane.f32.xlu0 %v1483
        %v1485 = vpop.xlane.xlu0 %1484
        %v1486 = vsel %vm1288, %v1468, -inf
        %1487 = vmax.xlane.f32.xlu0 %v1486
        %v1488 = vpop.xlane.xlu0 %1487
        %v1489 = vmax.f32 %v1473, %v1479
        %v1490 = vmax.f32 %v1474, %v1482
        %v1491 = vmax.f32 %v1475, %v1485
        %v1492 = vmax.f32 %v1476, %v1488
        %v1493 = vsub.f32 %v1473, %v1489
        %v1494 = vsub.f32 %v1474, %v1490
        %v1495 = vsub.f32 %v1475, %v1491
        %v1496 = vsub.f32 %v1476, %v1492
        %v1497 = vmul.f32 %v1493, 1.442695
        %v1498 = vpow.pop %v1497
        %v1499 = vmul.f32 %v1494, 1.442695
        %v1500 = vpow.pop %v1499
        %v1501 = vmul.f32 %v1495, 1.442695
        %v1502 = vpow.pop %v1501
        %v1503 = vmul.f32 %v1496, 1.442695
        %v1504 = vpow.pop %v1503
        %1506 = vset.pattern.permute.xlu0 0
        %1507 = vperm.xlu0 %1506, %v1489
        %v1508 = vpop.permute.xlu0 %1507
        %1511 = vset.pattern.permute.xlu0 0
        %1512 = vperm.xlu0 %1511, %v1490
        %v1513 = vpop.permute.xlu0 %1512
        %1516 = vset.pattern.permute.xlu0 0
        %1517 = vperm.xlu0 %1516, %v1491
        %v1518 = vpop.permute.xlu0 %1517
        %1521 = vset.pattern.permute.xlu0 0
        %1522 = vperm.xlu0 %1521, %v1492
        %v1523 = vpop.permute.xlu0 %1522
        %v1525 = vsub.f32 %v1330, %v1508
        %v1526 = vsub.f32 %v1376, %v1513
        %v1527 = vsub.f32 %v1422, %v1518
        %v1528 = vsub.f32 %v1468, %v1523
        %v1529 = vmul.f32 %v1525, 1.442695
        %v1530 = vpow.pop %v1529
        %v1531 = vmul.f32 %v1526, 1.442695
        %v1532 = vpow.pop %v1531
        %v1533 = vmul.f32 %v1527, 1.442695
        %v1534 = vpow.pop %v1533
        %v1535 = vmul.f32 %v1528, 1.442695
        %v1536 = vpow.pop %v1535
        %v1537 = vld [vmem:[#allocation4] sm:$0xff]
        %v1538 = vld [vmem:[#allocation4 + $0x8] sm:$0xff]
        %v1539 = vld [vmem:[#allocation4 + $0x10] sm:$0xff]
        %v1540 = vld [vmem:[#allocation4 + $0x18] sm:$0xff]
        %v1541 = vmul.f32 %v1498, %v1537
        %v1542 = vmul.f32 %v1500, %v1538
        %v1543 = vmul.f32 %v1502, %v1539
        %v1544 = vmul.f32 %v1504, %v1540
        %v1545 = vsel %vm1288, %v1530, 0.0
        %1546 = vadd.xlane.f32.xlu0 %v1545
        %v1547 = vpop.xlane.xlu0 %1546
        %v1548 = vsel %vm1288, %v1532, 0.0
        %1549 = vadd.xlane.f32.xlu0 %v1548
        %v1550 = vpop.xlane.xlu0 %1549
        %v1551 = vsel %vm1288, %v1534, 0.0
        %1552 = vadd.xlane.f32.xlu0 %v1551
        %v1553 = vpop.xlane.xlu0 %1552
        %v1554 = vsel %vm1288, %v1536, 0.0
        %1555 = vadd.xlane.f32.xlu0 %v1554
        %v1556 = vpop.xlane.xlu0 %1555
        %v1557 = vadd.f32 %v1541, %v1547
        %v1558 = vadd.f32 %v1542, %v1550
        %v1559 = vadd.f32 %v1543, %v1553
        %v1560 = vadd.f32 %v1544, %v1556
        %vm1561 = vcmask 7168
        %1562 = vst.msk [vmem:[#allocation4] sm:$0xff] %vm1561, %v1557
        %1563 = vst.msk [vmem:[#allocation4 + $0x8] sm:$0xff] %vm1561, %v1558
        %1564 = vst.msk [vmem:[#allocation4 + $0x10] sm:$0xff] %vm1561, %v1559
        %1565 = vst.msk [vmem:[#allocation4 + $0x18] sm:$0xff] %vm1561, %v1560
        %v1566 = vld [vmem:[#allocation5] sm:$0xff]
        %v1567 = vld [vmem:[#allocation5 + $0x8] sm:$0xff]
        %v1568 = vld [vmem:[#allocation5 + $0x10] sm:$0xff]
        %v1569 = vld [vmem:[#allocation5 + $0x18] sm:$0xff]
        %1571 = vset.pattern.permute.xlu0 0
        %1572 = vperm.xlu0 %1571, %v1498
        %v1573 = vpop.permute.xlu0 %1572
        %1576 = vset.pattern.permute.xlu0 0
        %1577 = vperm.xlu0 %1576, %v1500
        %v1578 = vpop.permute.xlu0 %1577
        %1581 = vset.pattern.permute.xlu0 0
        %1582 = vperm.xlu0 %1581, %v1502
        %v1583 = vpop.permute.xlu0 %1582
        %1586 = vset.pattern.permute.xlu0 0
        %1587 = vperm.xlu0 %1586, %v1504
        %v1588 = vpop.permute.xlu0 %1587
        %v1590 = vmul.f32 %v1573, %v1566
        %v1591 = vmul.f32 %v1578, %v1567
        %v1592 = vmul.f32 %v1583, %v1568
        %v1593 = vmul.f32 %v1588, %v1569
        %v1594 = vpack.c.bf16 %v1530, %v1530
        %v1595 = vpack.c.bf16 %v1532, %v1532
        %v1596 = vpack.c.bf16 %v1534, %v1534
        %v1597 = vpack.c.bf16 %v1536, %v1536
        %v1599 = vsel %vm1288, %v1594, 0
        %vm1601 = vcmask 1043456
        %v1603 = vsel %vm1601, %v1274, 0
        %1605 = vmatprep.subr.bf16.mxu0 0
        %1606 = vmatpush1.bf16.msra.mxu0 %v1603
        %1607 = vmatprep.subr.bf16.mxu0 0
        %1608 = vmatpush1.bf16.msra.mxu0 0
        %1609 = vmatprep.subr.bf16.mxu0 0
        %1610 = vmatpush1.bf16.msra.mxu0 0
        %1611 = vmatprep.subr.bf16.mxu0 0
        %1612 = vmatpush1.bf16.msra.mxu0 0
        %1613 = vmatprep.subr.bf16.mxu0 0
        %1614 = vmatpush1.bf16.msra.mxu0 0
        %1615 = vmatprep.subr.bf16.mxu0 0
        %1616 = vmatpush1.bf16.msra.mxu0 0
        %1617 = vmatprep.subr.bf16.mxu0 0
        %1618 = vmatpush1.bf16.msra.mxu0 0
        %1619 = vmatprep.subr.bf16.mxu0 0
        %1620 = vmatpush1.bf16.msra.mxu0 0
        %1621 = vmatprep.subr.bf16.mxu0 0
        %1622 = vmatpush1.bf16.msra.mxu0 0
        %1623 = vmatprep.subr.bf16.mxu0 0
        %1624 = vmatpush1.bf16.msra.mxu0 0
        %1625 = vmatprep.subr.bf16.mxu0 0
        %1626 = vmatpush1.bf16.msra.mxu0 0
        %1627 = vmatprep.subr.bf16.mxu0 0
        %1628 = vmatpush1.bf16.msra.mxu0 0
        %1629 = vmatprep.subr.bf16.mxu0 0
        %1630 = vmatpush1.bf16.msra.mxu0 0
        %1631 = vmatprep.subr.bf16.mxu0 0
        %1632 = vmatpush1.bf16.msra.mxu0 0
        %1633 = vmatprep.subr.bf16.mxu0 0
        %1634 = vmatpush1.bf16.msra.mxu0 0
        %1635 = vmatprep.subr.bf16.mxu0 0
        %1636 = vmatpush1.bf16.msra.mxu0 0
        %1637 = vmatprep.mubr.bf16.mxu0 0
        %1638 = vmatmul.mubr.bf16.gmra.mrb[0].mxu0 %v1599
        %v1639 = vpop.f32.mrb[0].mxu0
        %v1640 = vadd.f32 0.0, %v1639
        %v1641 = vpop.f32.mrb[0].mxu0
        %v1642 = vpop.f32.mrb[0].mxu0
        %v1643 = vpop.f32.mrb[0].mxu0
        %1644 = vdwg.mxu0
        %v1646 = vsel %vm1288, %v1595, 0
        %v1649 = vsel %vm1601, %v1277, 0
        %1651 = vmatprep.subr.bf16.mxu0 0
        %1652 = vmatpush1.bf16.msra.mxu0 %v1649
        %1653 = vmatprep.subr.bf16.mxu0 0
        %1654 = vmatpush1.bf16.msra.mxu0 0
        %1655 = vmatprep.subr.bf16.mxu0 0
        %1656 = vmatpush1.bf16.msra.mxu0 0
        %1657 = vmatprep.subr.bf16.mxu0 0
        %1658 = vmatpush1.bf16.msra.mxu0 0
        %1659 = vmatprep.subr.bf16.mxu0 0
        %1660 = vmatpush1.bf16.msra.mxu0 0
        %1661 = vmatprep.subr.bf16.mxu0 0
        %1662 = vmatpush1.bf16.msra.mxu0 0
        %1663 = vmatprep.subr.bf16.mxu0 0
        %1664 = vmatpush1.bf16.msra.mxu0 0
        %1665 = vmatprep.subr.bf16.mxu0 0
        %1666 = vmatpush1.bf16.msra.mxu0 0
        %1667 = vmatprep.subr.bf16.mxu0 0
        %1668 = vmatpush1.bf16.msra.mxu0 0
        %1669 = vmatprep.subr.bf16.mxu0 0
        %1670 = vmatpush1.bf16.msra.mxu0 0
        %1671 = vmatprep.subr.bf16.mxu0 0
        %1672 = vmatpush1.bf16.msra.mxu0 0
        %1673 = vmatprep.subr.bf16.mxu0 0
        %1674 = vmatpush1.bf16.msra.mxu0 0
        %1675 = vmatprep.subr.bf16.mxu0 0
        %1676 = vmatpush1.bf16.msra.mxu0 0
        %1677 = vmatprep.subr.bf16.mxu0 0
        %1678 = vmatpush1.bf16.msra.mxu0 0
        %1679 = vmatprep.subr.bf16.mxu0 0
        %1680 = vmatpush1.bf16.msra.mxu0 0
        %1681 = vmatprep.subr.bf16.mxu0 0
        %1682 = vmatpush1.bf16.msra.mxu0 0
        %1683 = vmatprep.mubr.bf16.mxu0 0
        %1684 = vmatmul.mubr.bf16.gmra.mrb[0].mxu0 %v1646
        %v1685 = vpop.f32.mrb[0].mxu0
        %v1686 = vadd.f32 0.0, %v1685
        %v1687 = vpop.f32.mrb[0].mxu0
        %v1688 = vpop.f32.mrb[0].mxu0
        %v1689 = vpop.f32.mrb[0].mxu0
        %1690 = vdwg.mxu0
        %v1692 = vsel %vm1288, %v1596, 0
        %v1695 = vsel %vm1601, %v1280, 0
        %1697 = vmatprep.subr.bf16.mxu0 0
        %1698 = vmatpush1.bf16.msra.mxu0 %v1695
        %1699 = vmatprep.subr.bf16.mxu0 0
        %1700 = vmatpush1.bf16.msra.mxu0 0
        %1701 = vmatprep.subr.bf16.mxu0 0
        %1702 = vmatpush1.bf16.msra.mxu0 0
        %1703 = vmatprep.subr.bf16.mxu0 0
        %1704 = vmatpush1.bf16.msra.mxu0 0
        %1705 = vmatprep.subr.bf16.mxu0 0
        %1706 = vmatpush1.bf16.msra.mxu0 0
        %1707 = vmatprep.subr.bf16.mxu0 0
        %1708 = vmatpush1.bf16.msra.mxu0 0
        %1709 = vmatprep.subr.bf16.mxu0 0
        %1710 = vmatpush1.bf16.msra.mxu0 0
        %1711 = vmatprep.subr.bf16.mxu0 0
        %1712 = vmatpush1.bf16.msra.mxu0 0
        %1713 = vmatprep.subr.bf16.mxu0 0
        %1714 = vmatpush1.bf16.msra.mxu0 0
        %1715 = vmatprep.subr.bf16.mxu0 0
        %1716 = vmatpush1.bf16.msra.mxu0 0
        %1717 = vmatprep.subr.bf16.mxu0 0
        %1718 = vmatpush1.bf16.msra.mxu0 0
        %1719 = vmatprep.subr.bf16.mxu0 0
        %1720 = vmatpush1.bf16.msra.mxu0 0
        %1721 = vmatprep.subr.bf16.mxu0 0
        %1722 = vmatpush1.bf16.msra.mxu0 0
        %1723 = vmatprep.subr.bf16.mxu0 0
        %1724 = vmatpush1.bf16.msra.mxu0 0
        %1725 = vmatprep.subr.bf16.mxu0 0
        %1726 = vmatpush1.bf16.msra.mxu0 0
        %1727 = vmatprep.subr.bf16.mxu0 0
        %1728 = vmatpush1.bf16.msra.mxu0 0
        %1729 = vmatprep.mubr.bf16.mxu0 0
        %1730 = vmatmul.mubr.bf16.gmra.mrb[0].mxu0 %v1692
        %v1731 = vpop.f32.mrb[0].mxu0
        %v1732 = vadd.f32 0.0, %v1731
        %v1733 = vpop.f32.mrb[0].mxu0
        %v1734 = vpop.f32.mrb[0].mxu0
        %v1735 = vpop.f32.mrb[0].mxu0
        %1736 = vdwg.mxu0
        %v1738 = vsel %vm1288, %v1597, 0
        %v1741 = vsel %vm1601, %v1283, 0
        %1743 = vmatprep.subr.bf16.mxu0 0
        %1744 = vmatpush1.bf16.msra.mxu0 %v1741
        %1745 = vmatprep.subr.bf16.mxu0 0
        %1746 = vmatpush1.bf16.msra.mxu0 0
        %1747 = vmatprep.subr.bf16.mxu0 0
        %1748 = vmatpush1.bf16.msra.mxu0 0
        %1749 = vmatprep.subr.bf16.mxu0 0
        %1750 = vmatpush1.bf16.msra.mxu0 0
        %1751 = vmatprep.subr.bf16.mxu0 0
        %1752 = vmatpush1.bf16.msra.mxu0 0
        %1753 = vmatprep.subr.bf16.mxu0 0
        %1754 = vmatpush1.bf16.msra.mxu0 0
        %1755 = vmatprep.subr.bf16.mxu0 0
        %1756 = vmatpush1.bf16.msra.mxu0 0
        %1757 = vmatprep.subr.bf16.mxu0 0
        %1758 = vmatpush1.bf16.msra.mxu0 0
        %1759 = vmatprep.subr.bf16.mxu0 0
        %1760 = vmatpush1.bf16.msra.mxu0 0
        %1761 = vmatprep.subr.bf16.mxu0 0
        %1762 = vmatpush1.bf16.msra.mxu0 0
        %1763 = vmatprep.subr.bf16.mxu0 0
        %1764 = vmatpush1.bf16.msra.mxu0 0
        %1765 = vmatprep.subr.bf16.mxu0 0
        %1766 = vmatpush1.bf16.msra.mxu0 0
        %1767 = vmatprep.subr.bf16.mxu0 0
        %1768 = vmatpush1.bf16.msra.mxu0 0
        %1769 = vmatprep.subr.bf16.mxu0 0
        %1770 = vmatpush1.bf16.msra.mxu0 0
        %1771 = vmatprep.subr.bf16.mxu0 0
        %1772 = vmatpush1.bf16.msra.mxu0 0
        %1773 = vmatprep.subr.bf16.mxu0 0
        %1774 = vmatpush1.bf16.msra.mxu0 0
        %1775 = vmatprep.mubr.bf16.mxu0 0
        %1776 = vmatmul.mubr.bf16.gmra.mrb[0].mxu0 %v1738
        %v1777 = vpop.f32.mrb[0].mxu0
        %v1778 = vadd.f32 0.0, %v1777
        %v1779 = vpop.f32.mrb[0].mxu0
        %v1780 = vpop.f32.mrb[0].mxu0
        %v1781 = vpop.f32.mrb[0].mxu0
        %1782 = vdwg.mxu0
        %v1783 = vadd.f32 %v1590, %v1640
        %v1784 = vadd.f32 %v1591, %v1686
        %v1785 = vadd.f32 %v1592, %v1732
        %v1786 = vadd.f32 %v1593, %v1778
        %1787 = vst.msk [vmem:[#allocation5] sm:$0xff] %vm1288, %v1783
        %1788 = vst.msk [vmem:[#allocation5 + $0x8] sm:$0xff] %vm1288, %v1784
        %1789 = vst.msk [vmem:[#allocation5 + $0x10] sm:$0xff] %vm1288, %v1785
        %1790 = vst.msk [vmem:[#allocation5 + $0x18] sm:$0xff] %vm1288, %v1786
        %1791 = vst.msk [vmem:[#allocation3] sm:$0xff] %vm1561, %v1489
        %1792 = vst.msk [vmem:[#allocation3 + $0x8] sm:$0xff] %vm1561, %v1490
        %1793 = vst.msk [vmem:[#allocation3 + $0x10] sm:$0xff] %vm1561, %v1491
        %1794 = vst.msk [vmem:[#allocation3 + $0x18] sm:$0xff] %vm1561, %v1492
        // Predicated region
        $region93: #{tpu_custom_call.1} parent=63 // pred_check
          %p1795 = pneg %p546
        $region94: #{tpu_custom_call.1} parent=63 // pred_check_branch
          %1797 = sbr.rel (%p1795) target = $region96
        $region95: #{tpu_custom_call.1} parent=63 // pred_region
          %v1798 = vld [vmem:[#allocation5] sm:$0xff]
          %v1799 = vld [vmem:[#allocation5 + $0x8] sm:$0xff]
          %v1800 = vld [vmem:[#allocation5 + $0x10] sm:$0xff]
          %v1801 = vld [vmem:[#allocation5 + $0x18] sm:$0xff]
          %v1802 = vld [vmem:[#allocation4] sm:$0xff]
          %v1803 = vld [vmem:[#allocation4 + $0x8] sm:$0xff]
          %v1804 = vld [vmem:[#allocation4 + $0x10] sm:$0xff]
          %v1805 = vld [vmem:[#allocation4 + $0x18] sm:$0xff]
          %v1806 = vrcp.pop %v1802
          %v1807 = vrcp.pop %v1803
          %v1808 = vrcp.pop %v1804
          %v1809 = vrcp.pop %v1805
          %1811 = vset.pattern.permute.xlu0 0
          %1812 = vperm.xlu0 %1811, %v1806
          %v1813 = vpop.permute.xlu0 %1812
          %1816 = vset.pattern.permute.xlu0 0
          %1817 = vperm.xlu0 %1816, %v1807
          %v1818 = vpop.permute.xlu0 %1817
          %1821 = vset.pattern.permute.xlu0 0
          %1822 = vperm.xlu0 %1821, %v1808
          %v1823 = vpop.permute.xlu0 %1822
          %1826 = vset.pattern.permute.xlu0 0
          %1827 = vperm.xlu0 %1826, %v1809
          %v1828 = vpop.permute.xlu0 %1827
          %v1830 = vmul.f32 %v1798, %v1813
          %v1831 = vmul.f32 %v1799, %v1818
          %v1832 = vmul.f32 %v1800, %v1823
          %v1833 = vmul.f32 %v1801, %v1828
          %v1834 = vpack.c.bf16 %v1830, %v1830
          %v1836 = vunpack.c.l.s4 1983009808
          %v1837 = vunpack.c.0.s8 %v1836
          %v1838 = vlaneseq
          %v1839 = vshrl.u32 %v1838, 7
          %v1840 = vsub.s32 %v1837, %v1839
          %v1841 = vrot.slane %v1834, %v1840
          %v1842 = vpack.c.bf16 %v1832, %v1832
          %v1844 = vunpack.c.l.s4 1983009808
          %v1845 = vunpack.c.0.s8 %v1844
          %v1846 = vlaneseq
          %v1847 = vshrl.u32 %v1846, 7
          %v1848 = vsub.s32 %v1845, %v1847
          %v1849 = vrot.slane %v1842, %v1848
          %v1850 = vcombine.low %v1841, %v1849
          %v1851 = vcombine.high %v1841, %v1849
          %v1853 = vunpack.c.l.s4 1934713408
          %v1854 = vunpack.c.0.s8 %v1853
          %v1855 = vlaneseq
          %v1856 = vshrl.u32 %v1855, 7
          %v1857 = vsub.s32 %v1854, %v1856
          %v1858 = vrot.slane %v1850, %v1857
          %v1860 = vunpack.c.l.s4 1934713408
          %v1861 = vunpack.c.0.s8 %v1860
          %v1862 = vlaneseq
          %v1863 = vshrl.u32 %v1862, 7
          %v1864 = vsub.s32 %v1861, %v1863
          %v1865 = vrot.slane %v1851, %v1864
          %v1866 = vcombine.high %v1858, 0
          %v1867 = vcombine.high %v1865, 0
          %v1868 = vpack.c.bf16 %v1831, %v1831
          %v1870 = vunpack.c.l.s4 1983009808
          %v1871 = vunpack.c.0.s8 %v1870
          %v1872 = vlaneseq
          %v1873 = vshrl.u32 %v1872, 7
          %v1874 = vsub.s32 %v1871, %v1873
          %v1875 = vrot.slane %v1868, %v1874
          %v1876 = vpack.c.bf16 %v1833, %v1833
          %v1878 = vunpack.c.l.s4 1983009808
          %v1879 = vunpack.c.0.s8 %v1878
          %v1880 = vlaneseq
          %v1881 = vshrl.u32 %v1880, 7
          %v1882 = vsub.s32 %v1879, %v1881
          %v1883 = vrot.slane %v1876, %v1882
          %v1884 = vcombine.low %v1875, %v1883
          %v1885 = vcombine.high %v1875, %v1883
          %v1887 = vunpack.c.l.s4 1934713408
          %v1888 = vunpack.c.0.s8 %v1887
          %v1889 = vlaneseq
          %v1890 = vshrl.u32 %v1889, 7
          %v1891 = vsub.s32 %v1888, %v1890
          %v1892 = vrot.slane %v1884, %v1891
          %v1894 = vunpack.c.l.s4 1934713408
          %v1895 = vunpack.c.0.s8 %v1894
          %v1896 = vlaneseq
          %v1897 = vshrl.u32 %v1896, 7
          %v1898 = vsub.s32 %v1895, %v1897
          %v1899 = vrot.slane %v1885, %v1898
          %v1900 = vcombine.high %v1892, 0
          %v1901 = vcombine.high %v1899, 0
          %v1904 = vpack.i.b16 %v1892, %v1858
          %v1906 = vshrl.u32 %v1858, 16
          %v1907 = vshrl.u32 %v1892, 16
          %v1908 = vpack.i.b16 %v1907, %v1906
          %v1912 = vpack.i.b16 %v1900, %v1866
          %v1914 = vshrl.u32 %v1866, 16
          %v1915 = vshrl.u32 %v1900, 16
          %v1916 = vpack.i.b16 %v1915, %v1914
          %v1920 = vpack.i.b16 %v1899, %v1865
          %v1922 = vshrl.u32 %v1865, 16
          %v1923 = vshrl.u32 %v1899, 16
          %v1924 = vpack.i.b16 %v1923, %v1922
          %v1928 = vpack.i.b16 %v1901, %v1867
          %v1930 = vshrl.u32 %v1867, 16
          %v1931 = vshrl.u32 %v1901, 16
          %v1932 = vpack.i.b16 %v1931, %v1930
          %v1934 = vcombine.low %v1904, %v1920
          %v1936 = vunpack.c.l.s4 1983009808
          %v1937 = vunpack.c.0.s8 %v1936
          %v1938 = vlaneseq
          %v1939 = vshrl.u32 %v1938, 7
          %v1940 = vsub.s32 %v1937, %v1939
          %v1941 = vrot.slane %v1934, %v1940
          %v1942 = vcombine.low %v1912, %v1928
          %v1944 = vunpack.c.l.s4 1983009808
          %v1945 = vunpack.c.0.s8 %v1944
          %v1946 = vlaneseq
          %v1947 = vshrl.u32 %v1946, 7
          %v1948 = vsub.s32 %v1945, %v1947
          %v1949 = vrot.slane %v1942, %v1948
          %v1950 = vcombine.low %v1941, %v1949
          %v1952 = vunpack.c.l.s4 1934713408
          %v1953 = vunpack.c.0.s8 %v1952
          %v1954 = vlaneseq
          %v1955 = vshrl.u32 %v1954, 7
          %v1956 = vsub.s32 %v1953, %v1955
          %v1957 = vrot.slane %v1950, %v1956
          %v1958 = vcombine.high %v1957, 0
          %v1959 = vcombine.low %v1908, %v1924
          %v1961 = vunpack.c.l.s4 1983009808
          %v1962 = vunpack.c.0.s8 %v1961
          %v1963 = vlaneseq
          %v1964 = vshrl.u32 %v1963, 7
          %v1965 = vsub.s32 %v1962, %v1964
          %v1966 = vrot.slane %v1959, %v1965
          %v1967 = vcombine.low %v1916, %v1932
          %v1969 = vunpack.c.l.s4 1983009808
          %v1970 = vunpack.c.0.s8 %v1969
          %v1971 = vlaneseq
          %v1972 = vshrl.u32 %v1971, 7
          %v1973 = vsub.s32 %v1970, %v1972
          %v1974 = vrot.slane %v1967, %v1973
          %v1975 = vcombine.low %v1966, %v1974
          %v1977 = vunpack.c.l.s4 1934713408
          %v1978 = vunpack.c.0.s8 %v1977
          %v1979 = vlaneseq
          %v1980 = vshrl.u32 %v1979, 7
          %v1981 = vsub.s32 %v1978, %v1980
          %v1982 = vrot.slane %v1975, %v1981
          %v1983 = vcombine.high %v1982, 0
          %v1986 = vpack.i.b16 %v1982, %v1957
          %v1987 = vshrl.u32 %v1957, 16
          %v1988 = vshrl.u32 %v1982, 16
          %v1989 = vpack.i.b16 %v1988, %v1987
          %v1992 = vpack.i.b16 %v1983, %v1958
          %v1993 = vshrl.u32 %v1958, 16
          %v1994 = vshrl.u32 %v1983, 16
          %v1995 = vpack.i.b16 %v1994, %v1993
          %1996 = vrot.lane.b32.xlu0 %v1989, 8
          %v1997 = vpop.permute.xlu0 %1996
          %1998 = vrot.lane.b32.xlu0 %v1992, 16
          %v1999 = vpop.permute.xlu0 %1998
          %2000 = vrot.lane.b32.xlu0 %v1995, 24
          %v2001 = vpop.permute.xlu0 %2000
          %v2004 = vsel %vm1288, %v1986, %v1997
          %vm2005 = vcmask 130048
          %v2007 = vsel %vm2005, %v2004, %v1999
          %vm2008 = vcmask 195584
          %v2010 = vsel %vm2008, %v2007, %v2001
          %v2011 = vld [vmem:[%s9] sm:$0xf]
          %v2012 = vld [vmem:[%s9 + $0x4] sm:$0xf]
          %v2013 = vld [vmem:[%s9 + $0x8] sm:$0xf]
          %v2014 = vld [vmem:[%s9 + $0xc] sm:$0xf]
          %v2015 = vld [vmem:[%s10] sm:$0x1]
          %v2017 = vlaneseq
          %v2018 = vshrl.u32 %v2017, 7
          %v2019 = vsub.s32 0, %v2018
          %v2020 = vrot.slane %v2015, %v2019
          %v2026 = vunpack.c.l.b16 %v2011
          %v2027 = vunpack.c.l.b16 %v2012
          %v2028 = vunpack.c.l.b16 %v2013
          %v2029 = vunpack.c.l.b16 %v2014
          %v2030 = vpack.c.b16 %v2027, %v2026
          %v2031 = vpack.c.b16 %v2029, %v2028
          %v2034 = vsel %vm835, %v2010, 0
          %2036 = vmatprep.subr.bf16.mxu0 0
          %2037 = vmatpush1.bf16.msra.mxu0 %v2030
          %2038 = vmatprep.subr.bf16.mxu0 0
          %2039 = vmatpush1.bf16.msra.mxu0 %v2031
          %2040 = vmatprep.subr.bf16.mxu0 0
          %2041 = vmatpush1.bf16.msra.mxu0 0
          %2042 = vmatprep.subr.bf16.mxu0 0
          %2043 = vmatpush1.bf16.msra.mxu0 0
          %2044 = vmatprep.subr.bf16.mxu0 0
          %2045 = vmatpush1.bf16.msra.mxu0 0
          %2046 = vmatprep.subr.bf16.mxu0 0
          %2047 = vmatpush1.bf16.msra.mxu0 0
          %2048 = vmatprep.subr.bf16.mxu0 0
          %2049 = vmatpush1.bf16.msra.mxu0 0
          %2050 = vmatprep.subr.bf16.mxu0 0
          %2051 = vmatpush1.bf16.msra.mxu0 0
          %2052 = vmatprep.subr.bf16.mxu0 0
          %2053 = vmatpush1.bf16.msra.mxu0 0
          %2054 = vmatprep.subr.bf16.mxu0 0
          %2055 = vmatpush1.bf16.msra.mxu0 0
          %2056 = vmatprep.subr.bf16.mxu0 0
          %2057 = vmatpush1.bf16.msra.mxu0 0
          %2058 = vmatprep.subr.bf16.mxu0 0
          %2059 = vmatpush1.bf16.msra.mxu0 0
          %2060 = vmatprep.subr.bf16.mxu0 0
          %2061 = vmatpush1.bf16.msra.mxu0 0
          %2062 = vmatprep.subr.bf16.mxu0 0
          %2063 = vmatpush1.bf16.msra.mxu0 0
          %2064 = vmatprep.subr.bf16.mxu0 0
          %2065 = vmatpush1.bf16.msra.mxu0 0
          %2066 = vmatprep.subr.bf16.mxu0 0
          %2067 = vmatpush1.bf16.msra.mxu0 0
          %2068 = vmatprep.mubr.bf16.mxu0 0
          %2069 = vmatmul.mubr.bf16.gmra.mrb[0].mxu0 %v2034
          %v2070 = vpop.f32.mrb[0].mxu0
          %v2071 = vadd.f32 %v2020, %v2070
          %v2072 = vpop.f32.mrb[0].mxu0
          %v2073 = vpop.f32.mrb[0].mxu0
          %v2074 = vpop.f32.mrb[0].mxu0
          %2075 = vdwg.mxu0
          %2076 = vst.msk [vmem:[%s544] sm:$0xff] %vm835, %v2071
        $region96: #{tpu_custom_call.1} parent=63 // pred_fallthru
          _
        %s2077 = sand.u32 %s314, 1
        %s2078 = scalar_lea.sflag [#allocation8], %s2077
        %s2079 = sand.u32 %s314, 1
        %s2080 = smul.addr %s2079, 8
        %s2081 = scalar_lea.vmem [#allocation17], %s2080
        // Predicated region
        $region97: #{tpu_custom_call.1} parent=63 // pred_check
          %p2082 = pneg %p324
        $region98: #{tpu_custom_call.1} parent=63 // pred_check_branch
          %2084 = sbr.rel (%p2082) target = $region100
        $region99: #{tpu_custom_call.1} parent=63 // pred_region
          %s2086 = ssub.s32 128, 128
          %2087 = vsyncadd %s2078, %s2086
          %s2088 = sadd.s32 %s39, %s38
          %s2089 = smul.addr %s2088, 128
          %s2090 = scalar_lea.hbm %s11, %s2089
          %s2092 = sshll.u32 %s2081, 4
          %s2093 = int_to_ptr.vmem [resolvable:$true] %s2092
          %2095 = dma.vmem_to_hbm [thread:$0]  %s2093, 128, %s2090, %s2078
        $region100: #{tpu_custom_call.1} parent=63 // pred_fallthru
          _
      $region64: #{tpu_custom_call.1} parent=5 // pred_fallthru
        _
      %p2096 = scmp.le.s32.totalorder 2, %s28
      // Predicated region
      $region101: #{tpu_custom_call.1} parent=5 // pred_check
        %p2097 = pneg %p2096
      $region102: #{tpu_custom_call.1} parent=5 // pred_check_branch
        %2099 = sbr.rel (%p2097) target = $region104
      $region103: #{tpu_custom_call.1} parent=5 // pred_region
        %s2100 = ssub.s32 %s28, 2
        // Predicated region
        $region105: #{tpu_custom_call.1} parent=103 // pred_check
          %p2101 = pneg %p330
        $region106: #{tpu_custom_call.1} parent=103 // pred_check_branch
          %2103 = sbr.rel (%p2101) target = $region108
        $region107: #{tpu_custom_call.1} parent=103 // pred_region
          %s2104 = sand.u32 %s315, 1
          %s2105 = scalar_lea.sflag [#allocation8], %s2104
          %s2106 = sand.u32 %s315, 1
          %s2107 = smul.addr %s2106, 8
          %s2108 = scalar_lea.vmem [#allocation17], %s2107
          %2109 = dma.done %s2105, 128
        $region108: #{tpu_custom_call.1} parent=103 // pred_fallthru
          _
      $region104: #{tpu_custom_call.1} parent=5 // pred_fallthru
        _
    $region6: #{tpu_custom_call.1} parent=1 // loop_footer
      %s32 = sadd.s32 1, %s28
    $region7: #{tpu_custom_call.1} parent=1 // loop_footer_branch
      %27 = sbr.rel target = $region3
    $region8: #{tpu_custom_call.1} parent=1 // loop_exit
      _
    %2110 = vsyncpa [#allocation7], 1
    %s2111 = scalar_lea.sflag [#allocation7], 1
    %2112 = vsyncpa %s2111, 1
    %2113 = vsyncpa [#allocation10], 1
    %s2114 = scalar_lea.sflag [#allocation10], 1
    %2115 = vsyncpa %s2114, 1
    %2116 = vsyncpa [#allocation13], 1
    %2117 = vsyncpa [#allocation16], 1
    %2118 = vsyncpa [#allocation8], 1
    %s2119 = scalar_lea.sflag [#allocation8], 1
    %2120 = vsyncpa %s2119, 1

</llo_original>
